<compile_context>
chip_gen: v5e
topology: v5e:2x2
jax: 0.10.0
libtpu: 0.0.40
codegen_flags: <defaults>
</compile_context>

<pallas_src>
import jax
import jax.numpy as jnp
from jax.experimental import pallas as pl
from jax.experimental.pallas import tpu as pltpu

CPAD = 8  # coordinate dim (3) zero-padded to 8; spare lanes carry |x|^2 / |y|^2 / 1


def _chamfer_kernel(x_ref, y_ref, s1_ref, s2_ref, d_ref, rowmin_ref, colmin_ref):
    """One (batch, N-tile, M-tile) grid step.

    x_ref     : (1, TN, CPAD)      augmented p1 tile, points on sublanes
    y_ref     : (1, CPAD, TM)      augmented p2 tile, points on lanes
    s1_ref    : (1, 1, 1)          per-batch sum of sqrt(d1)  (revisited)
    s2_ref    : (1, 1, 1)          per-batch sum of sqrt(d2)  (revisited)
    d_ref     : (TN, TM)   VMEM    the one materialized distance tile
    rowmin_ref: (TN, 128)  VMEM    running lane-folded min_j, reset at j==0
    colmin_ref: (nJ, 8, TM) VMEM   running sublane-folded min_i, reset at i==0
    """
    i = pl.program_id(1)
    j = pl.program_id(2)
    n_i = pl.num_programs(1)
    n_j = pl.num_programs(2)

    tn, tm = d_ref.shape

    # ---- per-batch init of the scalar accumulators (written once per batch) --
    @pl.when(jnp.logical_and(i == 0, j == 0))
    def _():
        s1_ref[...] = jnp.zeros_like(s1_ref)
        s2_ref[...] = jnp.zeros_like(s2_ref)

    # Full squared-distance tile straight off the MXU (norms folded into the
    # padded contraction lanes), materialized exactly once in VMEM.
    d_ref[...] = jnp.dot(x_ref[0], y_ref[0],
                         preferred_element_type=jnp.float32)      # (tn, tm)

    # -------------------- d1: per-p1-point running min over j ----------------
    # Fold the tm/128 lane blocks (static 128-aligned ref views, pure VPU)
    # down to a (tn, 128) partial before touching the rowmin scratch.
    rm = d_ref[:, 0:128]
    for lb in range(1, tm // 128):
        rm = jnp.minimum(rm, d_ref[:, lb * 128:(lb + 1) * 128])

    @pl.when(j == 0)
    def _():
        rowmin_ref[...] = rm

    @pl.when(j > 0)
    def _():
        rowmin_ref[...] = jnp.minimum(rowmin_ref[...], rm)        # VPU elementwise

    @pl.when(j == n_j - 1)
    def _():
        # single (128-lane) cross-lane reduce per (batch, i-tile)
        rmin = jnp.min(rowmin_ref[...], axis=1, keepdims=True)    # (tn, 1)
        s1_ref[...] += jnp.sum(jnp.sqrt(jnp.maximum(rmin, 0.0)))

    # -------------------- d2: per-p2-point running min over i ----------------
    # Narrow 2-wide fold over the tn/8 sublane blocks (static 8-aligned ref
    # views): bounded live vregs, still enough ILP to hide VALU latency.
    nsb = tn // 8

    def sub(k):
        return d_ref[k * 8:(k + 1) * 8, :]

    if nsb == 1:
        t2f = sub(0)
    else:
        acc0 = sub(0)
        acc1 = sub(1)
        k = 2
        while k + 1 < nsb:
            acc0 = jnp.minimum(acc0, sub(k))
            acc1 = jnp.minimum(acc1, sub(k + 1))
            k += 2
        if k < nsb:
            acc0 = jnp.minimum(acc0, sub(k))
        t2f = jnp.minimum(acc0, acc1)                             # (8, tm)

    @pl.when(i == 0)
    def _():
        colmin_ref[j] = t2f

    @pl.when(i > 0)
    def _():
        colmin_ref[j] = jnp.minimum(colmin_ref[j], t2f)           # VPU elementwise

    @pl.when(i == n_i - 1)
    def _():
        # single 8-sublane reduce per (batch, j-tile)
        cmin = jnp.min(colmin_ref[j], axis=0, keepdims=True)      # (1, tm)
        s2_ref[...] += jnp.sum(jnp.sqrt(jnp.maximum(cmin, 0.0)))


def cd_loss_l1(p1, p2, *, tile_n=256, tile_m=1024):
    """Chamfer-L1 loss:  (mean(sqrt(d1)) + mean(sqrt(d2))) / 2."""
    B, N, C = p1.shape
    B2, M, C2 = p2.shape
    assert B == B2 and C == 3 and C2 == 3

    tn = min(tile_n, N)
    tm = min(tile_m, M)
    # TODO(synk): pad + mask ragged point counts (padded points need +inf in
    # the min paths and exclusion from the mean denominators).
    assert N % tn == 0 and tn % 8 == 0, (N, tn)
    assert M % tm == 0 and tm % 128 == 0, (M, tm)

    p1f = p1.astype(jnp.float32)
    p2f = p2.astype(jnp.float32)

    # O(B*(N+M)) layout plumbing (vs the O(B*N*M) kernel): fold the squared
    # norms into the spare padded contraction lanes so the kernel's single
    # f32 MXU matmul emits d = |x|^2 + |y|^2 - 2 x.y directly.  Augment
    # columns stay f32 to keep the cancellation-prone expansion accurate.
    xx = jnp.sum(p1f * p1f, axis=-1, keepdims=True)               # (B, N, 1)
    yy = jnp.sum(p2f * p2f, axis=-1, keepdims=True)               # (B, M, 1)
    x_aug = jnp.concatenate(
        [p1f, xx, jnp.ones_like(xx),
         jnp.zeros((B, N, CPAD - 5), jnp.float32)], axis=-1)      # (B, N, 8)
    y_aug = jnp.concatenate(
        [-2.0 * p2f, jnp.ones_like(yy), yy,
         jnp.zeros((B, M, CPAD - 5), jnp.float32)], axis=-1)      # (B, M, 8)
    y_aug = jnp.transpose(y_aug, (0, 2, 1))                       # (B, 8, M)

    grid = (B, N // tn, M // tm)

    s1p, s2p = pl.pallas_call(
        _chamfer_kernel,
        out_shape=(
            jax.ShapeDtypeStruct((B, 1, 1), jnp.float32),
            jax.ShapeDtypeStruct((B, 1, 1), jnp.float32),
        ),
        grid_spec=pltpu.PrefetchScalarGridSpec(
            num_scalar_prefetch=0,
            grid=grid,
            in_specs=[
                pl.BlockSpec((1, tn, CPAD), lambda b, i, j: (b, i, 0)),
                # TODO(synk): optionally keep the whole per-batch (CPAD, M)
                # y slab resident (index_map (b,0,0)) and pl.ds the j-tile
                # in-kernel to avoid N/tn re-reads; minor, needs dynamic
                # lane-offset loads.
                pl.BlockSpec((1, CPAD, tm), lambda b, i, j: (b, 0, j)),
            ],
            out_specs=(
                pl.BlockSpec((1, 1, 1), lambda b, i, j: (b, 0, 0)),
                pl.BlockSpec((1, 1, 1), lambda b, i, j: (b, 0, 0)),
            ),
            scratch_shapes=[
                pltpu.VMEM((tn, tm), jnp.float32),           # distance tile
                pltpu.VMEM((tn, 128), jnp.float32),          # rowmin (d1)
                pltpu.VMEM((M // tm, 8, tm), jnp.float32),   # colmin (d2)
            ],
        ),
        compiler_params=pltpu.CompilerParams(
            # batch tiles are independent -> megacore-parallel on v7x;
            # i/j carry running-min state -> arbitrary (sequential).
            # TODO(synk): for B == 1 on v7x, add a leading parallel axis that
            # halves N and combine the halves' colmin partials in JAX.
            dimension_semantics=("parallel", "arbitrary", "arbitrary"),
            vmem_limit_bytes=32 * 1024 * 1024,
        ),
    )(x_aug, y_aug)

    d1_mean = jnp.sum(s1p) / (B * N)
    d2_mean = jnp.sum(s2p) / (B * M)
    return (d1_mean + d2_mean) * 0.5


def _cd_loss_l1_ref(p1, p2):
    """Pure-JAX reference for correctness checking."""
    diff = p1[:, :, None, :] - p2[:, None, :, :]          # (B, N, M, 3)
    d = jnp.sum(diff * diff, axis=-1)                     # (B, N, M)
    d1 = jnp.min(d, axis=2)                               # (B, N)
    d2 = jnp.min(d, axis=1)                               # (B, M)
    return (jnp.mean(jnp.sqrt(d1)) + jnp.mean(jnp.sqrt(d2))) * 0.5


if __name__ == "__main__":
    key = jax.random.PRNGKey(0)
    k1, k2 = jax.random.split(key)
    # Small but multi-tile shapes: with tile_n=256 / tile_m=512 the grid is
    # (B=2, 2, 2), exercising every reset / fold / finalize branch.
    B, N, M = 2, 512, 1024
    p1 = jax.random.uniform(k1, (B, N, 3), dtype=jnp.float32)
    p2 = jax.random.uniform(k2, (B, M, 3), dtype=jnp.float32)

    ref = jax.block_until_ready(_cd_loss_l1_ref(p1, p2))

    # Multi-tile config (exercises j>0 / i>0 running-min folds).
    loss = jax.block_until_ready(cd_loss_l1(p1, p2, tile_n=256, tile_m=512))
    assert jnp.allclose(loss, ref, rtol=5e-4, atol=1e-5), (loss, ref)

    # Default (larger) tile config as well.
    loss2 = jax.block_until_ready(cd_loss_l1(p1, p2))
    assert jnp.allclose(loss2, ref, rtol=5e-4, atol=1e-5), (loss2, ref)

    print("KERNEL_OK")
</pallas_src>

<mosaic_0001>
module attributes {stable_mosaic.version = 11 : i64} {
  func.func @_chamfer_kernel(%arg0: i32, %arg1: i32, %arg2: i32, %arg3: memref<1x256x8xf32, #tpu.memory_space<vmem>>, %arg4: memref<1x8x512xf32, #tpu.memory_space<vmem>>, %arg5: memref<1x1x1xf32, #tpu.memory_space<vmem>>, %arg6: memref<1x1x1xf32, #tpu.memory_space<vmem>>, %arg7: memref<256x512xf32, #tpu.memory_space<vmem>>, %arg8: memref<256x128xf32, #tpu.memory_space<vmem>>, %arg9: memref<2x8x512xf32, #tpu.memory_space<vmem>>) attributes {dimension_semantics = [#tpu.dimension_semantics<parallel>, #tpu.dimension_semantics<arbitrary>, #tpu.dimension_semantics<arbitrary>], iteration_bounds = array<i64: 2, 2, 2>, scalar_prefetch = 0 : i64, scratch_operands = 3 : i64, tpu.core_type = #tpu.core_type<tc>, window_params = [{transform_indices = @transform_0, window_bounds = array<i64: 1, 256, 8>}, {transform_indices = @transform_1, window_bounds = array<i64: 1, 8, 512>}, {transform_indices = @transform_2, window_bounds = array<i64: 1, 1, 1>}, {transform_indices = @transform_3, window_bounds = array<i64: 1, 1, 1>}]} {
    %c0_i32 = arith.constant 0 : i32
    %0 = arith.cmpi eq, %arg1, %c0_i32 : i32
    %c0_i32_0 = arith.constant 0 : i32
    %1 = arith.cmpi eq, %arg2, %c0_i32_0 : i32
    %2 = arith.andi %0, %1 : i1
    %3 = arith.extui %2 : i1 to i32
    %c0_i32_1 = arith.constant 0 : i32
    %4 = arith.cmpi ne, %3, %c0_i32_1 : i32
    scf.if %4 {
      %cst_59 = arith.constant 0.000000e+00 : f32
      %99 = vector.broadcast %cst_59 : f32 to vector<1x1x1xf32>
      %c0_60 = arith.constant 0 : index
      %c0_61 = arith.constant 0 : index
      %c0_62 = arith.constant 0 : index
      %100 = vector.load %arg5[%c0_60, %c0_61, %c0_62] : memref<1x1x1xf32, #tpu.memory_space<vmem>>, vector<1x1x1xf32>
      tpu.vector_store %arg5[%c0_60, %c0_61, %c0_62], %99 {strides = array<i32>} : memref<1x1x1xf32, #tpu.memory_space<vmem>>, vector<1x1x1xf32>,
      %cst_63 = arith.constant 0.000000e+00 : f32
      %101 = vector.broadcast %cst_63 : f32 to vector<1x1x1xf32>
      %c0_64 = arith.constant 0 : index
      %c0_65 = arith.constant 0 : index
      %c0_66 = arith.constant 0 : index
      %102 = vector.load %arg6[%c0_64, %c0_65, %c0_66] : memref<1x1x1xf32, #tpu.memory_space<vmem>>, vector<1x1x1xf32>
      tpu.vector_store %arg6[%c0_64, %c0_65, %c0_66], %101 {strides = array<i32>} : memref<1x1x1xf32, #tpu.memory_space<vmem>>, vector<1x1x1xf32>,
    } else {
    }
    %c0 = arith.constant 0 : index
    %c0_2 = arith.constant 0 : index
    %c0_3 = arith.constant 0 : index
    %5 = vector.load %arg3[%c0, %c0_2, %c0_3] : memref<1x256x8xf32, #tpu.memory_space<vmem>>, vector<1x256x8xf32>
    %6 = vector.shape_cast %5 : vector<1x256x8xf32> to vector<256x8xf32>
    %c0_4 = arith.constant 0 : index
    %c0_5 = arith.constant 0 : index
    %c0_6 = arith.constant 0 : index
    %7 = vector.load %arg4[%c0_4, %c0_5, %c0_6] : memref<1x8x512xf32, #tpu.memory_space<vmem>>, vector<1x8x512xf32>
    %8 = vector.shape_cast %7 : vector<1x8x512xf32> to vector<8x512xf32>
    %cst = arith.constant dense<0.000000e+00> : vector<256x512xf32>
    %9 = tpu.matmul %6, %8, %cst {dimension_numbers = #tpu.dot_dimension_numbers<[1], [0], [0], [1], [0, 0, 1, 1], [], []>} : vector<256x8xf32>, vector<8x512xf32>, vector<256x512xf32> -> vector<256x512xf32>
    %c0_7 = arith.constant 0 : index
    %c0_8 = arith.constant 0 : index
    %10 = vector.load %arg7[%c0_7, %c0_8] : memref<256x512xf32, #tpu.memory_space<vmem>>, vector<256x512xf32>
    tpu.vector_store %arg7[%c0_7, %c0_8], %9 {strides = array<i32>} : memref<256x512xf32, #tpu.memory_space<vmem>>, vector<256x512xf32>,
    %c0_9 = arith.constant 0 : index
    %c0_10 = arith.constant 0 : index
    %11 = vector.load %arg7[%c0_9, %c0_10] : memref<256x512xf32, #tpu.memory_space<vmem>>, vector<256x128xf32>
    %c0_11 = arith.constant 0 : index
    %c128 = arith.constant 128 : index
    %12 = vector.load %arg7[%c0_11, %c128] : memref<256x512xf32, #tpu.memory_space<vmem>>, vector<256x128xf32>
    %13 = arith.minimumf %11, %12 : vector<256x128xf32>
    %c0_12 = arith.constant 0 : index
    %c256 = arith.constant 256 : index
    %14 = vector.load %arg7[%c0_12, %c256] : memref<256x512xf32, #tpu.memory_space<vmem>>, vector<256x128xf32>
    %15 = arith.minimumf %13, %14 : vector<256x128xf32>
    %c0_13 = arith.constant 0 : index
    %c384 = arith.constant 384 : index
    %16 = vector.load %arg7[%c0_13, %c384] : memref<256x512xf32, #tpu.memory_space<vmem>>, vector<256x128xf32>
    %17 = arith.minimumf %15, %16 : vector<256x128xf32>
    %c0_i32_14 = arith.constant 0 : i32
    %18 = arith.cmpi eq, %arg2, %c0_i32_14 : i32
    %19 = arith.extui %18 : i1 to i32
    %c0_i32_15 = arith.constant 0 : i32
    %20 = arith.cmpi ne, %19, %c0_i32_15 : i32
    scf.if %20 {
      %c0_59 = arith.constant 0 : index
      %c0_60 = arith.constant 0 : index
      %99 = vector.load %arg8[%c0_59, %c0_60] : memref<256x128xf32, #tpu.memory_space<vmem>>, vector<256x128xf32>
      tpu.vector_store %arg8[%c0_59, %c0_60], %17 {strides = array<i32>} : memref<256x128xf32, #tpu.memory_space<vmem>>, vector<256x128xf32>,
    } else {
    }
    %c0_i32_16 = arith.constant 0 : i32
    %21 = arith.cmpi sgt, %arg2, %c0_i32_16 : i32
    %22 = arith.extui %21 : i1 to i32
    %c0_i32_17 = arith.constant 0 : i32
    %23 = arith.cmpi ne, %22, %c0_i32_17 : i32
    scf.if %23 {
      %c0_59 = arith.constant 0 : index
      %c0_60 = arith.constant 0 : index
      %99 = vector.load %arg8[%c0_59, %c0_60] : memref<256x128xf32, #tpu.memory_space<vmem>>, vector<256x128xf32>
      %100 = arith.minimumf %99, %17 : vector<256x128xf32>
      %c0_61 = arith.constant 0 : index
      %c0_62 = arith.constant 0 : index
      %101 = vector.load %arg8[%c0_61, %c0_62] : memref<256x128xf32, #tpu.memory_space<vmem>>, vector<256x128xf32>
      tpu.vector_store %arg8[%c0_61, %c0_62], %100 {strides = array<i32>} : memref<256x128xf32, #tpu.memory_space<vmem>>, vector<256x128xf32>,
    } else {
    }
    %c1_i32 = arith.constant 1 : i32
    %24 = arith.cmpi eq, %arg2, %c1_i32 : i32
    %25 = arith.extui %24 : i1 to i32
    %c0_i32_18 = arith.constant 0 : i32
    %26 = arith.cmpi ne, %25, %c0_i32_18 : i32
    scf.if %26 {
      %c0_59 = arith.constant 0 : index
      %c0_60 = arith.constant 0 : index
      %99 = vector.load %arg8[%c0_59, %c0_60] : memref<256x128xf32, #tpu.memory_space<vmem>>, vector<256x128xf32>
      %cst_61 = arith.constant dense<0x7F800000> : vector<256xf32>
      %100 = vector.multi_reduction <minimumf>, %99, %cst_61 [1] : vector<256x128xf32> to vector<256xf32>
      %101 = vector.shape_cast %100 : vector<256xf32> to vector<256x1xf32>
      %c0_62 = arith.constant 0 : index
      %c0_63 = arith.constant 0 : index
      %c0_64 = arith.constant 0 : index
      %102 = vector.load %arg5[%c0_62, %c0_63, %c0_64] : memref<1x1x1xf32, #tpu.memory_space<vmem>>, vector<1x1x1xf32>
      %cst_65 = arith.constant 0.000000e+00 : f32
      %103 = vector.broadcast %cst_65 : f32 to vector<256x1xf32>
      %104 = arith.maximumf %101, %103 : vector<256x1xf32>
      %105 = math.sqrt %104 : vector<256x1xf32>
      %106 = vector.shape_cast %105 : vector<256x1xf32> to vector<1x256x1xf32>
      %cst_66 = arith.constant dense<0.000000e+00> : vector<1xf32>
      %107 = vector.multi_reduction <add>, %106, %cst_66 [1, 2] : vector<1x256x1xf32> to vector<1xf32>
      %108 = vector.shape_cast %107 : vector<1xf32> to vector<1x1x1xf32>
      %109 = vector.extract %108[0, 0, 0] : f32 from vector<1x1x1xf32>
      %110 = vector.broadcast %109 : f32 to vector<1x1x1xf32>
      %111 = arith.addf %102, %110 : vector<1x1x1xf32>
      %c0_67 = arith.constant 0 : index
      %c0_68 = arith.constant 0 : index
      %c0_69 = arith.constant 0 : index
      %112 = vector.load %arg5[%c0_67, %c0_68, %c0_69] : memref<1x1x1xf32, #tpu.memory_space<vmem>>, vector<1x1x1xf32>
      tpu.vector_store %arg5[%c0_67, %c0_68, %c0_69], %111 {strides = array<i32>} : memref<1x1x1xf32, #tpu.memory_space<vmem>>, vector<1x1x1xf32>,
    } else {
    }
    %c0_19 = arith.constant 0 : index
    %c0_20 = arith.constant 0 : index
    %27 = vector.load %arg7[%c0_19, %c0_20] : memref<256x512xf32, #tpu.memory_space<vmem>>, vector<8x512xf32>
    %c8 = arith.constant 8 : index
    %c0_21 = arith.constant 0 : index
    %28 = vector.load %arg7[%c8, %c0_21] : memref<256x512xf32, #tpu.memory_space<vmem>>, vector<8x512xf32>
    %c16 = arith.constant 16 : index
    %c0_22 = arith.constant 0 : index
    %29 = vector.load %arg7[%c16, %c0_22] : memref<256x512xf32, #tpu.memory_space<vmem>>, vector<8x512xf32>
    %30 = arith.minimumf %27, %29 : vector<8x512xf32>
    %c24 = arith.constant 24 : index
    %c0_23 = arith.constant 0 : index
    %31 = vector.load %arg7[%c24, %c0_23] : memref<256x512xf32, #tpu.memory_space<vmem>>, vector<8x512xf32>
    %32 = arith.minimumf %28, %31 : vector<8x512xf32>
    %c32 = arith.constant 32 : index
    %c0_24 = arith.constant 0 : index
    %33 = vector.load %arg7[%c32, %c0_24] : memref<256x512xf32, #tpu.memory_space<vmem>>, vector<8x512xf32>
    %34 = arith.minimumf %30, %33 : vector<8x512xf32>
    %c40 = arith.constant 40 : index
    %c0_25 = arith.constant 0 : index
    %35 = vector.load %arg7[%c40, %c0_25] : memref<256x512xf32, #tpu.memory_space<vmem>>, vector<8x512xf32>
    %36 = arith.minimumf %32, %35 : vector<8x512xf32>
    %c48 = arith.constant 48 : index
    %c0_26 = arith.constant 0 : index
    %37 = vector.load %arg7[%c48, %c0_26] : memref<256x512xf32, #tpu.memory_space<vmem>>, vector<8x512xf32>
    %38 = arith.minimumf %34, %37 : vector<8x512xf32>
    %c56 = arith.constant 56 : index
    %c0_27 = arith.constant 0 : index
    %39 = vector.load %arg7[%c56, %c0_27] : memref<256x512xf32, #tpu.memory_space<vmem>>, vector<8x512xf32>
    %40 = arith.minimumf %36, %39 : vector<8x512xf32>
    %c64 = arith.constant 64 : index
    %c0_28 = arith.constant 0 : index
    %41 = vector.load %arg7[%c64, %c0_28] : memref<256x512xf32, #tpu.memory_space<vmem>>, vector<8x512xf32>
    %42 = arith.minimumf %38, %41 : vector<8x512xf32>
    %c72 = arith.constant 72 : index
    %c0_29 = arith.constant 0 : index
    %43 = vector.load %arg7[%c72, %c0_29] : memref<256x512xf32, #tpu.memory_space<vmem>>, vector<8x512xf32>
    %44 = arith.minimumf %40, %43 : vector<8x512xf32>
    %c80 = arith.constant 80 : index
    %c0_30 = arith.constant 0 : index
    %45 = vector.load %arg7[%c80, %c0_30] : memref<256x512xf32, #tpu.memory_space<vmem>>, vector<8x512xf32>
    %46 = arith.minimumf %42, %45 : vector<8x512xf32>
    %c88 = arith.constant 88 : index
    %c0_31 = arith.constant 0 : index
    %47 = vector.load %arg7[%c88, %c0_31] : memref<256x512xf32, #tpu.memory_space<vmem>>, vector<8x512xf32>
    %48 = arith.minimumf %44, %47 : vector<8x512xf32>
    %c96 = arith.constant 96 : index
    %c0_32 = arith.constant 0 : index
    %49 = vector.load %arg7[%c96, %c0_32] : memref<256x512xf32, #tpu.memory_space<vmem>>, vector<8x512xf32>
    %50 = arith.minimumf %46, %49 : vector<8x512xf32>
    %c104 = arith.constant 104 : index
    %c0_33 = arith.constant 0 : index
    %51 = vector.load %arg7[%c104, %c0_33] : memref<256x512xf32, #tpu.memory_space<vmem>>, vector<8x512xf32>
    %52 = arith.minimumf %48, %51 : vector<8x512xf32>
    %c112 = arith.constant 112 : index
    %c0_34 = arith.constant 0 : index
    %53 = vector.load %arg7[%c112, %c0_34] : memref<256x512xf32, #tpu.memory_space<vmem>>, vector<8x512xf32>
    %54 = arith.minimumf %50, %53 : vector<8x512xf32>
    %c120 = arith.constant 120 : index
    %c0_35 = arith.constant 0 : index
    %55 = vector.load %arg7[%c120, %c0_35] : memref<256x512xf32, #tpu.memory_space<vmem>>, vector<8x512xf32>
    %56 = arith.minimumf %52, %55 : vector<8x512xf32>
    %c128_36 = arith.constant 128 : index
    %c0_37 = arith.constant 0 : index
    %57 = vector.load %arg7[%c128_36, %c0_37] : memref<256x512xf32, #tpu.memory_space<vmem>>, vector<8x512xf32>
    %58 = arith.minimumf %54, %57 : vector<8x512xf32>
    %c136 = arith.constant 136 : index
    %c0_38 = arith.constant 0 : index
    %59 = vector.load %arg7[%c136, %c0_38] : memref<256x512xf32, #tpu.memory_space<vmem>>, vector<8x512xf32>
    %60 = arith.minimumf %56, %59 : vector<8x512xf32>
    %c144 = arith.constant 144 : index
    %c0_39 = arith.constant 0 : index
    %61 = vector.load %arg7[%c144, %c0_39] : memref<256x512xf32, #tpu.memory_space<vmem>>, vector<8x512xf32>
    %62 = arith.minimumf %58, %61 : vector<8x512xf32>
    %c152 = arith.constant 152 : index
    %c0_40 = arith.constant 0 : index
    %63 = vector.load %arg7[%c152, %c0_40] : memref<256x512xf32, #tpu.memory_space<vmem>>, vector<8x512xf32>
    %64 = arith.minimumf %60, %63 : vector<8x512xf32>
    %c160 = arith.constant 160 : index
    %c0_41 = arith.constant 0 : index
    %65 = vector.load %arg7[%c160, %c0_41] : memref<256x512xf32, #tpu.memory_space<vmem>>, vector<8x512xf32>
    %66 = arith.minimumf %62, %65 : vector<8x512xf32>
    %c168 = arith.constant 168 : index
    %c0_42 = arith.constant 0 : index
    %67 = vector.load %arg7[%c168, %c0_42] : memref<256x512xf32, #tpu.memory_space<vmem>>, vector<8x512xf32>
    %68 = arith.minimumf %64, %67 : vector<8x512xf32>
    %c176 = arith.constant 176 : index
    %c0_43 = arith.constant 0 : index
    %69 = vector.load %arg7[%c176, %c0_43] : memref<256x512xf32, #tpu.memory_space<vmem>>, vector<8x512xf32>
    %70 = arith.minimumf %66, %69 : vector<8x512xf32>
    %c184 = arith.constant 184 : index
    %c0_44 = arith.constant 0 : index
    %71 = vector.load %arg7[%c184, %c0_44] : memref<256x512xf32, #tpu.memory_space<vmem>>, vector<8x512xf32>
    %72 = arith.minimumf %68, %71 : vector<8x512xf32>
    %c192 = arith.constant 192 : index
    %c0_45 = arith.constant 0 : index
    %73 = vector.load %arg7[%c192, %c0_45] : memref<256x512xf32, #tpu.memory_space<vmem>>, vector<8x512xf32>
    %74 = arith.minimumf %70, %73 : vector<8x512xf32>
    %c200 = arith.constant 200 : index
    %c0_46 = arith.constant 0 : index
    %75 = vector.load %arg7[%c200, %c0_46] : memref<256x512xf32, #tpu.memory_space<vmem>>, vector<8x512xf32>
    %76 = arith.minimumf %72, %75 : vector<8x512xf32>
    %c208 = arith.constant 208 : index
    %c0_47 = arith.constant 0 : index
    %77 = vector.load %arg7[%c208, %c0_47] : memref<256x512xf32, #tpu.memory_space<vmem>>, vector<8x512xf32>
    %78 = arith.minimumf %74, %77 : vector<8x512xf32>
    %c216 = arith.constant 216 : index
    %c0_48 = arith.constant 0 : index
    %79 = vector.load %arg7[%c216, %c0_48] : memref<256x512xf32, #tpu.memory_space<vmem>>, vector<8x512xf32>
    %80 = arith.minimumf %76, %79 : vector<8x512xf32>
    %c224 = arith.constant 224 : index
    %c0_49 = arith.constant 0 : index
    %81 = vector.load %arg7[%c224, %c0_49] : memref<256x512xf32, #tpu.memory_space<vmem>>, vector<8x512xf32>
    %82 = arith.minimumf %78, %81 : vector<8x512xf32>
    %c232 = arith.constant 232 : index
    %c0_50 = arith.constant 0 : index
    %83 = vector.load %arg7[%c232, %c0_50] : memref<256x512xf32, #tpu.memory_space<vmem>>, vector<8x512xf32>
    %84 = arith.minimumf %80, %83 : vector<8x512xf32>
    %c240 = arith.constant 240 : index
    %c0_51 = arith.constant 0 : index
    %85 = vector.load %arg7[%c240, %c0_51] : memref<256x512xf32, #tpu.memory_space<vmem>>, vector<8x512xf32>
    %86 = arith.minimumf %82, %85 : vector<8x512xf32>
    %c248 = arith.constant 248 : index
    %c0_52 = arith.constant 0 : index
    %87 = vector.load %arg7[%c248, %c0_52] : memref<256x512xf32, #tpu.memory_space<vmem>>, vector<8x512xf32>
    %88 = arith.minimumf %84, %87 : vector<8x512xf32>
    %89 = arith.minimumf %86, %88 : vector<8x512xf32>
    %c0_i32_53 = arith.constant 0 : i32
    %90 = arith.cmpi eq, %arg1, %c0_i32_53 : i32
    %91 = arith.extui %90 : i1 to i32
    %c0_i32_54 = arith.constant 0 : i32
    %92 = arith.cmpi ne, %91, %c0_i32_54 : i32
    scf.if %92 {
      %99 = arith.index_cast %arg2 : i32 to index
      %c0_59 = arith.constant 0 : index
      %c0_60 = arith.constant 0 : index
      %100 = vector.load %arg9[%99, %c0_59, %c0_60] : memref<2x8x512xf32, #tpu.memory_space<vmem>>, vector<1x8x512xf32>
      %101 = vector.shape_cast %100 : vector<1x8x512xf32> to vector<8x512xf32>
      %102 = vector.shape_cast %89 : vector<8x512xf32> to vector<1x8x512xf32>
      tpu.vector_store %arg9[%99, %c0_59, %c0_60], %102 {strides = array<i32>} : memref<2x8x512xf32, #tpu.memory_space<vmem>>, vector<1x8x512xf32>,
    } else {
    }
    %c0_i32_55 = arith.constant 0 : i32
    %93 = arith.cmpi sgt, %arg1, %c0_i32_55 : i32
    %94 = arith.extui %93 : i1 to i32
    %c0_i32_56 = arith.constant 0 : i32
    %95 = arith.cmpi ne, %94, %c0_i32_56 : i32
    scf.if %95 {
      %99 = arith.index_cast %arg2 : i32 to index
      %c0_59 = arith.constant 0 : index
      %c0_60 = arith.constant 0 : index
      %100 = vector.load %arg9[%99, %c0_59, %c0_60] : memref<2x8x512xf32, #tpu.memory_space<vmem>>, vector<1x8x512xf32>
      %101 = vector.shape_cast %100 : vector<1x8x512xf32> to vector<8x512xf32>
      %102 = arith.minimumf %101, %89 : vector<8x512xf32>
      %103 = arith.index_cast %arg2 : i32 to index
      %c0_61 = arith.constant 0 : index
      %c0_62 = arith.constant 0 : index
      %104 = vector.load %arg9[%103, %c0_61, %c0_62] : memref<2x8x512xf32, #tpu.memory_space<vmem>>, vector<1x8x512xf32>
      %105 = vector.shape_cast %104 : vector<1x8x512xf32> to vector<8x512xf32>
      %106 = vector.shape_cast %102 : vector<8x512xf32> to vector<1x8x512xf32>
      tpu.vector_store %arg9[%103, %c0_61, %c0_62], %106 {strides = array<i32>} : memref<2x8x512xf32, #tpu.memory_space<vmem>>, vector<1x8x512xf32>,
    } else {
    }
    %c1_i32_57 = arith.constant 1 : i32
    %96 = arith.cmpi eq, %arg1, %c1_i32_57 : i32
    %97 = arith.extui %96 : i1 to i32
    %c0_i32_58 = arith.constant 0 : i32
    %98 = arith.cmpi ne, %97, %c0_i32_58 : i32
    scf.if %98 {
      %99 = arith.index_cast %arg2 : i32 to index
      %c0_59 = arith.constant 0 : index
      %c0_60 = arith.constant 0 : index
      %100 = vector.load %arg9[%99, %c0_59, %c0_60] : memref<2x8x512xf32, #tpu.memory_space<vmem>>, vector<1x8x512xf32>
      %101 = vector.shape_cast %100 : vector<1x8x512xf32> to vector<8x512xf32>
      %cst_61 = arith.constant dense<0x7F800000> : vector<512xf32>
      %102 = vector.multi_reduction <minimumf>, %101, %cst_61 [0] : vector<8x512xf32> to vector<512xf32>
      %103 = vector.shape_cast %102 : vector<512xf32> to vector<1x512xf32>
      %c0_62 = arith.constant 0 : index
      %c0_63 = arith.constant 0 : index
      %c0_64 = arith.constant 0 : index
      %104 = vector.load %arg6[%c0_62, %c0_63, %c0_64] : memref<1x1x1xf32, #tpu.memory_space<vmem>>, vector<1x1x1xf32>
      %cst_65 = arith.constant 0.000000e+00 : f32
      %105 = vector.broadcast %cst_65 : f32 to vector<1x512xf32>
      %106 = arith.maximumf %103, %105 : vector<1x512xf32>
      %107 = math.sqrt %106 : vector<1x512xf32>
      %108 = vector.shape_cast %107 : vector<1x512xf32> to vector<1x1x512xf32>
      %cst_66 = arith.constant dense<0.000000e+00> : vector<1xf32>
      %109 = vector.multi_reduction <add>, %108, %cst_66 [1, 2] : vector<1x1x512xf32> to vector<1xf32>
      %110 = vector.shape_cast %109 : vector<1xf32> to vector<1x1x1xf32>
      %111 = vector.extract %110[0, 0, 0] : f32 from vector<1x1x1xf32>
      %112 = vector.broadcast %111 : f32 to vector<1x1x1xf32>
      %113 = arith.addf %104, %112 : vector<1x1x1xf32>
      %c0_67 = arith.constant 0 : index
      %c0_68 = arith.constant 0 : index
      %c0_69 = arith.constant 0 : index
      %114 = vector.load %arg6[%c0_67, %c0_68, %c0_69] : memref<1x1x1xf32, #tpu.memory_space<vmem>>, vector<1x1x1xf32>
      tpu.vector_store %arg6[%c0_67, %c0_68, %c0_69], %113 {strides = array<i32>} : memref<1x1x1xf32, #tpu.memory_space<vmem>>, vector<1x1x1xf32>,
    } else {
    }
    return
  }
  func.func @transform_0(%arg0: i32, %arg1: i32, %arg2: i32) -> (i32, i32, i32) {
    %c0_i32 = arith.constant 0 : i32
    %c0_i32_0 = arith.constant 0 : i32
    return %arg0, %arg1, %c0_i32 : i32, i32, i32
  }
  func.func @transform_1(%arg0: i32, %arg1: i32, %arg2: i32) -> (i32, i32, i32) {
    %c0_i32 = arith.constant 0 : i32
    %c0_i32_0 = arith.constant 0 : i32
    return %arg0, %c0_i32, %arg2 : i32, i32, i32
  }
  func.func @transform_2(%arg0: i32, %arg1: i32, %arg2: i32) -> (i32, i32, i32) {
    %c0_i32 = arith.constant 0 : i32
    %c0_i32_0 = arith.constant 0 : i32
    %c0_i32_1 = arith.constant 0 : i32
    return %arg0, %c0_i32, %c0_i32_0 : i32, i32, i32
  }
  func.func @transform_3(%arg0: i32, %arg1: i32, %arg2: i32) -> (i32, i32, i32) {
    %c0_i32 = arith.constant 0 : i32
    %c0_i32_0 = arith.constant 0 : i32
    %c0_i32_1 = arith.constant 0 : i32
    return %arg0, %c0_i32, %c0_i32_0 : i32, i32, i32
  }
}

</mosaic_0001>

<llo_original>
// kernel: tpu_custom_call.1
$region0: #{tpu_custom_call.1}
  #allocation0 [shape = 'u32[]', space=smem, size = 0x4, offset = 0x4, fixed_abs, tag = 'smem constant byte address 0x4 - core index']
  #allocation1 [shape = 'u32[72,128]{1,0:T(1,128)}', space=vmem, size = 0x9000, scoped, tag = 'internal scratch']
  #allocation2 [shape = 'f32[256,512]{1,0:T(8,128)}', space=vmem, size = 0x80000, scoped, tag = 'scratch operand']
  #allocation3 [shape = 'f32[256,128]{1,0:T(8,128)}', space=vmem, size = 0x20000, scoped, tag = 'scratch operand']
  #allocation4 [shape = 'f32[2,8,512]{2,1,0:T(8,128)}', space=vmem, size = 0x8000, scoped, tag = 'scratch operand']
  %s0 = inlined_call_operand.vmem [shape: f32[2,512,8], index: 0, kind: input, shape index: {}]
  %s1 = inlined_call_operand.vmem [shape: f32[2,8,1024], index: 1, kind: input, shape index: {}]
  %s2 = inlined_call_operand.vmem [shape: f32[2,1,1], index: 2, kind: output, shape index: {0}]
  %s3 = inlined_call_operand.vmem [shape: f32[2,1,1], index: 3, kind: output, shape index: {1}]
  %4 = xla_tuple %s2, %s3
  %s5 = sld [smem:[#allocation0]]
  $region77: #{tpu_custom_call.1} parent=0
    _
  %s7 = ssub.s32 1, %s5
  %s8 = scalar_select 0, %s7, %s5
  loop: start=0, step=1, limit=10
  $region2: #{tpu_custom_call.1} parent=0 // loop_pre_header
    _
  $region3: #{tpu_custom_call.1} parent=0 // loop_header
    %s10 = sphi 0, %s14
    %p11 = scmp.ge.s32.totalorder %s10, 10
    %s17 = sphi 0, %s36
    %s18 = sphi 0, %s32
    %s19 = sphi 0, %s28
    %s20 = sphi 0, %s17
    %s21 = sphi 0, %s18
    %s22 = sphi 0, %s19
    %s23 = sphi 0, %s20
    %s24 = sphi 0, %s21
    %s25 = sphi 0, %s22
    %s41 = sphi 0, %s43
    %s44 = sphi 0, %s41
    %s45 = sphi 0, %s44
    %s61 = sphi 0, %s45
    %s69 = sphi 0, %s71
    %s72 = sphi 0, %s69
    %s73 = sphi 0, %s72
    %s89 = sphi 0, %s73
    %s95 = sphi 0, %s97
    %s98 = sphi 0, %s95
    %s99 = sphi 0, %s98
    %s115 = sphi 0, %s99
    %s121 = sphi 0, %s123
    %s124 = sphi 0, %s121
    %s125 = sphi 0, %s124
    %s141 = sphi 0, %s125
  $region4: #{tpu_custom_call.1} parent=0 // loop_header_branch
    %13 = sbr.rel (%p11) target = $region8
  $region5: #{tpu_custom_call.1} parent=0 // loop_body
    %s15 = ssub.s32 %s10, 1
    %s16 = ssub.s32 %s10, 2
    %s26 = sadd.s32 1, %s19
    %p27 = scmp.ge.s32.totalorder %s26, 2
    %s28 = scalar_select %p27, 0, %s26
    %s29 = sadd.s32 1, %s18
    %s30 = scalar_select %p27, %s29, %s18
    %p31 = scmp.ge.s32.totalorder %s30, 2
    %s32 = scalar_select %p31, 0, %s30
    %s33 = sadd.s32 1, %s17
    %s34 = scalar_select %p31, %s33, %s17
    %p35 = scmp.ge.s32.totalorder %s34, 2
    %s36 = scalar_select %p35, 0, %s34
    %s37 = ssub.s32 %s17, %s36
    %s38 = ssub.s32 %s18, %s32
    %s39 = sor.u32 %s37, %s38
    %p40 = scmp.eq.s32.totalorder %s39, 0
    %s42 = sadd.s32 %s41, 1
    %s43 = scalar_select %p40, %s41, %s42
    %p46 = pneg %p40
    %p47 = scmp.eq.s32.totalorder %s10, 7
    %p48 = por %p46, %p47
    %p49 = scmp.ne.s32.totalorder %s41, %s44
    %p50 = scmp.eq.s32.totalorder %s10, 0
    %p51 = por %p49, %p50
    %p52 = scmp.ne.s32.totalorder %s41, %s44
    %p53 = scmp.eq.s32.totalorder %s15, 7
    %p54 = por %p52, %p53
    %p55 = scmp.ne.s32.totalorder %s44, %s45
    %p56 = scmp.eq.s32.totalorder %s15, 0
    %p57 = por %p55, %p56
    %p58 = scmp.ne.s32.totalorder %s44, %s45
    %p59 = scmp.eq.s32.totalorder %s16, 7
    %p60 = por %p58, %p59
    %p62 = scmp.ne.s32.totalorder %s45, %s61
    %p63 = scmp.eq.s32.totalorder %s16, 0
    %p64 = por %p62, %p63
    %s65 = ssub.s32 %s17, %s36
    %s66 = ssub.s32 %s19, %s28
    %s67 = sor.u32 %s65, %s66
    %p68 = scmp.eq.s32.totalorder %s67, 0
    %s70 = sadd.s32 %s69, 1
    %s71 = scalar_select %p68, %s69, %s70
    %p74 = pneg %p68
    %p75 = scmp.eq.s32.totalorder %s10, 7
    %p76 = por %p74, %p75
    %p77 = scmp.ne.s32.totalorder %s69, %s72
    %p78 = scmp.eq.s32.totalorder %s10, 0
    %p79 = por %p77, %p78
    %p80 = scmp.ne.s32.totalorder %s69, %s72
    %p81 = scmp.eq.s32.totalorder %s15, 7
    %p82 = por %p80, %p81
    %p83 = scmp.ne.s32.totalorder %s72, %s73
    %p84 = scmp.eq.s32.totalorder %s15, 0
    %p85 = por %p83, %p84
    %p86 = scmp.ne.s32.totalorder %s72, %s73
    %p87 = scmp.eq.s32.totalorder %s16, 7
    %p88 = por %p86, %p87
    %p90 = scmp.ne.s32.totalorder %s73, %s89
    %p91 = scmp.eq.s32.totalorder %s16, 0
    %p92 = por %p90, %p91
    %s93 = ssub.s32 %s17, %s36
    %p94 = scmp.eq.s32.totalorder %s93, 0
    %s96 = sadd.s32 %s95, 1
    %s97 = scalar_select %p94, %s95, %s96
    %p100 = pneg %p94
    %p101 = scmp.eq.s32.totalorder %s10, 7
    %p102 = por %p100, %p101
    %p103 = scmp.ne.s32.totalorder %s95, %s98
    %p104 = scmp.eq.s32.totalorder %s10, 0
    %p105 = por %p103, %p104
    %p106 = scmp.ne.s32.totalorder %s95, %s98
    %p107 = scmp.eq.s32.totalorder %s15, 7
    %p108 = por %p106, %p107
    %p109 = scmp.ne.s32.totalorder %s98, %s99
    %p110 = scmp.eq.s32.totalorder %s15, 0
    %p111 = por %p109, %p110
    %p112 = scmp.ne.s32.totalorder %s98, %s99
    %p113 = scmp.eq.s32.totalorder %s16, 7
    %p114 = por %p112, %p113
    %p116 = scmp.ne.s32.totalorder %s99, %s115
    %p117 = scmp.eq.s32.totalorder %s16, 0
    %p118 = por %p116, %p117
    %s119 = ssub.s32 %s17, %s36
    %p120 = scmp.eq.s32.totalorder %s119, 0
    %s122 = sadd.s32 %s121, 1
    %s123 = scalar_select %p120, %s121, %s122
    %p126 = pneg %p120
    %p127 = scmp.eq.s32.totalorder %s10, 7
    %p128 = por %p126, %p127
    %p129 = scmp.ne.s32.totalorder %s121, %s124
    %p130 = scmp.eq.s32.totalorder %s10, 0
    %p131 = por %p129, %p130
    %p132 = scmp.ne.s32.totalorder %s121, %s124
    %p133 = scmp.eq.s32.totalorder %s15, 7
    %p134 = por %p132, %p133
    %p135 = scmp.ne.s32.totalorder %s124, %s125
    %p136 = scmp.eq.s32.totalorder %s15, 0
    %p137 = por %p135, %p136
    %p138 = scmp.ne.s32.totalorder %s124, %s125
    %p139 = scmp.eq.s32.totalorder %s16, 7
    %p140 = por %p138, %p139
    %p142 = scmp.ne.s32.totalorder %s125, %s141
    %p143 = scmp.eq.s32.totalorder %s16, 0
    %p144 = por %p142, %p143
    %p145 = scmp.le.s32.totalorder 1, %s10
    %p146 = scmp.lt.s32.totalorder %s10, 9
    %p147 = pnand %p145, %p146
    %p148 = pneg %p147
    // Predicated region
    $region9: #{tpu_custom_call.1} parent=5 // pred_check
      _
    $region10: #{tpu_custom_call.1} parent=5 // pred_check_branch
      %150 = sbr.rel (%p147) target = $region12
    $region11: #{tpu_custom_call.1} parent=5 // pred_region
      %s151 = ssub.s32 %s10, 1
    $region12: #{tpu_custom_call.1} parent=5 // pred_fallthru
      _
    %p152 = scmp.lt.s32.totalorder %s10, 8
    // Predicated region
    $region13: #{tpu_custom_call.1} parent=5 // pred_check
      %p153 = pneg %p152
    $region14: #{tpu_custom_call.1} parent=5 // pred_check_branch
      %155 = sbr.rel (%p153) target = $region16
    $region15: #{tpu_custom_call.1} parent=5 // pred_region
      // Predicated region
      $region17: #{tpu_custom_call.1} parent=15 // pred_check
        %p156 = pneg %p51
      $region18: #{tpu_custom_call.1} parent=15 // pred_check_branch
        %158 = sbr.rel (%p156) target = $region20
      $region19: #{tpu_custom_call.1} parent=15 // pred_region
        %s159 = smul.u32 32, %s18
        %p160 = scmp.lt.s32.totalorder %s17, 1
        %s161 = scalar_select %p160, %s17, 1
        %p162 = scmp.lt.s32.totalorder %s159, 63
        %s163 = scalar_select %p162, %s159, 63
        %s164 = smul.addr %s161, 64
        %s165 = sadd.s32 %s163, %s164
        %s166 = smul.addr %s165, 8
        %s167 = scalar_lea.vmem %s0, %s166
        %s168 = smul.u32 32, %s18
      $region20: #{tpu_custom_call.1} parent=15 // pred_fallthru
        _
      // Predicated region
      $region21: #{tpu_custom_call.1} parent=15 // pred_check
        %p169 = pneg %p79
      $region22: #{tpu_custom_call.1} parent=15 // pred_check_branch
        %171 = sbr.rel (%p169) target = $region24
      $region23: #{tpu_custom_call.1} parent=15 // pred_region
        %s172 = smul.u32 4, %s19
        %p173 = scmp.lt.s32.totalorder %s17, 1
        %s174 = scalar_select %p173, %s17, 1
        %p175 = scmp.lt.s32.totalorder %s172, 7
        %s176 = scalar_select %p175, %s172, 7
        %s177 = smul.addr %s174, 8
        %s178 = sadd.s32 %s176, %s177
        %s179 = smul.addr %s178, 8
        %s180 = scalar_lea.vmem %s1, %s179
        %s181 = smul.u32 4, %s19
      $region24: #{tpu_custom_call.1} parent=15 // pred_fallthru
        _
    $region16: #{tpu_custom_call.1} parent=5 // pred_fallthru
      _
    %p182 = scmp.le.s32.totalorder 1, %s10
    %p183 = scmp.lt.s32.totalorder %s10, 9
    %p184 = pnand %p182, %p183
    %p185 = pneg %p184
    // Predicated region
    $region25: #{tpu_custom_call.1} parent=5 // pred_check
      _
    $region26: #{tpu_custom_call.1} parent=5 // pred_check_branch
      %187 = sbr.rel (%p184) target = $region28
    $region27: #{tpu_custom_call.1} parent=5 // pred_region
      %s188 = ssub.s32 %s10, 1
      %s189 = smul.u32 32, %s21
      %p190 = scmp.lt.s32.totalorder %s20, 1
      %s191 = scalar_select %p190, %s20, 1
      %p192 = scmp.lt.s32.totalorder %s189, 63
      %s193 = scalar_select %p192, %s189, 63
      %s194 = smul.addr %s191, 64
      %s195 = sadd.s32 %s193, %s194
      %s196 = smul.addr %s195, 8
      %s197 = scalar_lea.vmem %s0, %s196
      %p198 = pneg %p57
      %p199 = pneg %p54
      %s200 = smul.u32 4, %s22
      %p201 = scmp.lt.s32.totalorder %s20, 1
      %s202 = scalar_select %p201, %s20, 1
      %p203 = scmp.lt.s32.totalorder %s200, 7
      %s204 = scalar_select %p203, %s200, 7
      %s205 = smul.addr %s202, 8
      %s206 = sadd.s32 %s204, %s205
      %s207 = smul.addr %s206, 8
      %s208 = scalar_lea.vmem %s1, %s207
      %p209 = pneg %p85
      %p210 = pneg %p82
      %p211 = pneg %p111
      %p212 = pneg %p108
      %p213 = scmp.lt.s32.totalorder %s20, 1
      %s214 = scalar_select %p213, %s20, 1
      %s215 = scalar_lea.vmem %s2, %s214
      %p216 = pneg %p137
      %p217 = pneg %p134
      %p218 = scmp.lt.s32.totalorder %s20, 1
      %s219 = scalar_select %p218, %s20, 1
      %s220 = scalar_lea.vmem %s3, %s219
      %s221 = smul.u32 32, %s21
      %p222 = scmp.lt.s32.totalorder %s20, 1
      %s223 = scalar_select %p222, %s20, 1
      %p224 = scmp.lt.s32.totalorder %s221, 63
      %s225 = scalar_select %p224, %s221, 63
      %s226 = smul.addr %s223, 64
      %s227 = sadd.s32 %s225, %s226
      %s228 = smul.addr %s227, 8
      %s229 = scalar_lea.vmem %s0, %s228
      %s230 = smul.u32 32, %s21
      %s231 = smul.u32 4, %s22
      %p232 = scmp.lt.s32.totalorder %s20, 1
      %s233 = scalar_select %p232, %s20, 1
      %p234 = scmp.lt.s32.totalorder %s231, 7
      %s235 = scalar_select %p234, %s231, 7
      %s236 = smul.addr %s233, 8
      %s237 = sadd.s32 %s235, %s236
      %s238 = smul.addr %s237, 8
      %s239 = scalar_lea.vmem %s1, %s238
      %s240 = smul.u32 4, %s22
      %p241 = scmp.lt.s32.totalorder %s20, 1
      %s242 = scalar_select %p241, %s20, 1
      %s243 = scalar_lea.vmem %s2, %s242
      %p244 = scmp.lt.s32.totalorder %s20, 1
      %s245 = scalar_select %p244, %s20, 1
      %s246 = scalar_lea.vmem %s3, %s245
      %p247 = scmp.eq.s32.totalorder %s21, 0
      %p248 = scmp.eq.s32.totalorder %s22, 0
      %p249 = pnand %p247, %p248
      %p250 = pneg %p249
      // Predicated region
      $region29: #{tpu_custom_call.1} parent=27 // pred_check
        _
      $region30: #{tpu_custom_call.1} parent=27 // pred_check_branch
        %252 = sbr.rel (%p249) target = $region32
      $region31: #{tpu_custom_call.1} parent=27 // pred_region
        %vm253 = vcmask 0
        %254 = vst.msk [vmem:[%s243] sm:$0x1] %vm253, 0.0
        %255 = vst.msk [vmem:[%s246] sm:$0x1] %vm253, 0.0
      $region32: #{tpu_custom_call.1} parent=27 // pred_fallthru
        _
      %v256 = vld [vmem:[%s229] sm:$0xff]
      %v257 = vld [vmem:[%s229 + $0x8] sm:$0xff]
      %v258 = vld [vmem:[%s229 + $0x10] sm:$0xff]
      %v259 = vld [vmem:[%s229 + $0x18] sm:$0xff]
      %v260 = vld [vmem:[%s229 + $0x20] sm:$0xff]
      %v261 = vld [vmem:[%s229 + $0x28] sm:$0xff]
      %v262 = vld [vmem:[%s229 + $0x30] sm:$0xff]
      %v263 = vld [vmem:[%s229 + $0x38] sm:$0xff]
      %v264 = vld [vmem:[%s229 + $0x40] sm:$0xff]
      %v265 = vld [vmem:[%s229 + $0x48] sm:$0xff]
      %v266 = vld [vmem:[%s229 + $0x50] sm:$0xff]
      %v267 = vld [vmem:[%s229 + $0x58] sm:$0xff]
      %v268 = vld [vmem:[%s229 + $0x60] sm:$0xff]
      %v269 = vld [vmem:[%s229 + $0x68] sm:$0xff]
      %v270 = vld [vmem:[%s229 + $0x70] sm:$0xff]
      %v271 = vld [vmem:[%s229 + $0x78] sm:$0xff]
      %v272 = vld [vmem:[%s229 + $0x80] sm:$0xff]
      %v273 = vld [vmem:[%s229 + $0x88] sm:$0xff]
      %v274 = vld [vmem:[%s229 + $0x90] sm:$0xff]
      %v275 = vld [vmem:[%s229 + $0x98] sm:$0xff]
      %v276 = vld [vmem:[%s229 + $0xa0] sm:$0xff]
      %v277 = vld [vmem:[%s229 + $0xa8] sm:$0xff]
      %v278 = vld [vmem:[%s229 + $0xb0] sm:$0xff]
      %v279 = vld [vmem:[%s229 + $0xb8] sm:$0xff]
      %v280 = vld [vmem:[%s229 + $0xc0] sm:$0xff]
      %v281 = vld [vmem:[%s229 + $0xc8] sm:$0xff]
      %v282 = vld [vmem:[%s229 + $0xd0] sm:$0xff]
      %v283 = vld [vmem:[%s229 + $0xd8] sm:$0xff]
      %v284 = vld [vmem:[%s229 + $0xe0] sm:$0xff]
      %v285 = vld [vmem:[%s229 + $0xe8] sm:$0xff]
      %v286 = vld [vmem:[%s229 + $0xf0] sm:$0xff]
      %v287 = vld [vmem:[%s229 + $0xf8] sm:$0xff]
      %v288 = vld [vmem:[%s239] sm:$0xff]
      %v289 = vld [vmem:[%s239 + $0x8] sm:$0xff]
      %v290 = vld [vmem:[%s239 + $0x10] sm:$0xff]
      %v291 = vld [vmem:[%s239 + $0x18] sm:$0xff]
      %vm292 = vcmask 64512
      %v294 = vsel %vm292, %v256, 0
      %v297 = vsel %vm292, %v257, 0
      %v300 = vsel %vm292, %v258, 0
      %v303 = vsel %vm292, %v259, 0
      %v306 = vsel %vm292, %v260, 0
      %v309 = vsel %vm292, %v261, 0
      %v312 = vsel %vm292, %v262, 0
      %v315 = vsel %vm292, %v263, 0
      %v318 = vsel %vm292, %v264, 0
      %v321 = vsel %vm292, %v265, 0
      %v324 = vsel %vm292, %v266, 0
      %v327 = vsel %vm292, %v267, 0
      %v330 = vsel %vm292, %v268, 0
      %v333 = vsel %vm292, %v269, 0
      %v336 = vsel %vm292, %v270, 0
      %v339 = vsel %vm292, %v271, 0
      %v342 = vsel %vm292, %v272, 0
      %v345 = vsel %vm292, %v273, 0
      %v348 = vsel %vm292, %v274, 0
      %v351 = vsel %vm292, %v275, 0
      %v354 = vsel %vm292, %v276, 0
      %v357 = vsel %vm292, %v277, 0
      %v360 = vsel %vm292, %v278, 0
      %v363 = vsel %vm292, %v279, 0
      %v366 = vsel %vm292, %v280, 0
      %v369 = vsel %vm292, %v281, 0
      %v372 = vsel %vm292, %v282, 0
      %v375 = vsel %vm292, %v283, 0
      %v378 = vsel %vm292, %v284, 0
      %v381 = vsel %vm292, %v285, 0
      %v384 = vsel %vm292, %v286, 0
      %v387 = vsel %vm292, %v287, 0
      %389 = vmatpush.msra.mxu0 0.0
      %390 = vmatpush.msra.mxu0 0.0
      %391 = vmatpush.msra.mxu0 0.0
      %392 = vmatpush.msra.mxu0 0.0
      %393 = vmatpush.msra.mxu0 0.0
      %394 = vmatpush.msra.mxu0 0.0
      %395 = vmatpush.msra.mxu0 0.0
      %396 = vmatpush.msra.mxu0 0.0
      %397 = vmatpush.msra.mxu0 0.0
      %398 = vmatpush.msra.mxu0 0.0
      %399 = vmatpush.msra.mxu0 0.0
      %400 = vmatpush.msra.mxu0 0.0
      %401 = vmatpush.msra.mxu0 0.0
      %402 = vmatpush.msra.mxu0 0.0
      %403 = vmatpush.msra.mxu0 0.0
      %404 = vmatpush.msra.mxu0 %v288
      %405 = vmatmul.f32.gmra.mxu0 %v294
      %v406 = vpop.f32.mrf.mxu0
      %v407 = vadd.f32 0.0, %v406
      %408 = vmatmul.f32.gmra.mxu0 %v297
      %v409 = vpop.f32.mrf.mxu0
      %v410 = vadd.f32 0.0, %v409
      %411 = vmatmul.f32.gmra.mxu0 %v300
      %v412 = vpop.f32.mrf.mxu0
      %v413 = vadd.f32 0.0, %v412
      %414 = vmatmul.f32.gmra.mxu0 %v303
      %v415 = vpop.f32.mrf.mxu0
      %v416 = vadd.f32 0.0, %v415
      %417 = vmatmul.f32.gmra.mxu0 %v306
      %v418 = vpop.f32.mrf.mxu0
      %v419 = vadd.f32 0.0, %v418
      %420 = vmatmul.f32.gmra.mxu0 %v309
      %v421 = vpop.f32.mrf.mxu0
      %v422 = vadd.f32 0.0, %v421
      %423 = vmatmul.f32.gmra.mxu0 %v312
      %v424 = vpop.f32.mrf.mxu0
      %v425 = vadd.f32 0.0, %v424
      %426 = vmatmul.f32.gmra.mxu0 %v315
      %v427 = vpop.f32.mrf.mxu0
      %v428 = vadd.f32 0.0, %v427
      %429 = vmatmul.f32.gmra.mxu0 %v318
      %v430 = vpop.f32.mrf.mxu0
      %v431 = vadd.f32 0.0, %v430
      %432 = vmatmul.f32.gmra.mxu0 %v321
      %v433 = vpop.f32.mrf.mxu0
      %v434 = vadd.f32 0.0, %v433
      %435 = vmatmul.f32.gmra.mxu0 %v324
      %v436 = vpop.f32.mrf.mxu0
      %v437 = vadd.f32 0.0, %v436
      %438 = vmatmul.f32.gmra.mxu0 %v327
      %v439 = vpop.f32.mrf.mxu0
      %v440 = vadd.f32 0.0, %v439
      %441 = vmatmul.f32.gmra.mxu0 %v330
      %v442 = vpop.f32.mrf.mxu0
      %v443 = vadd.f32 0.0, %v442
      %444 = vmatmul.f32.gmra.mxu0 %v333
      %v445 = vpop.f32.mrf.mxu0
      %v446 = vadd.f32 0.0, %v445
      %447 = vmatmul.f32.gmra.mxu0 %v336
      %v448 = vpop.f32.mrf.mxu0
      %v449 = vadd.f32 0.0, %v448
      %450 = vmatmul.f32.gmra.mxu0 %v339
      %v451 = vpop.f32.mrf.mxu0
      %v452 = vadd.f32 0.0, %v451
      %453 = vmatmul.f32.gmra.mxu0 %v342
      %v454 = vpop.f32.mrf.mxu0
      %v455 = vadd.f32 0.0, %v454
      %456 = vmatmul.f32.gmra.mxu0 %v345
      %v457 = vpop.f32.mrf.mxu0
      %v458 = vadd.f32 0.0, %v457
      %459 = vmatmul.f32.gmra.mxu0 %v348
      %v460 = vpop.f32.mrf.mxu0
      %v461 = vadd.f32 0.0, %v460
      %462 = vmatmul.f32.gmra.mxu0 %v351
      %v463 = vpop.f32.mrf.mxu0
      %v464 = vadd.f32 0.0, %v463
      %465 = vmatmul.f32.gmra.mxu0 %v354
      %v466 = vpop.f32.mrf.mxu0
      %v467 = vadd.f32 0.0, %v466
      %468 = vmatmul.f32.gmra.mxu0 %v357
      %v469 = vpop.f32.mrf.mxu0
      %v470 = vadd.f32 0.0, %v469
      %471 = vmatmul.f32.gmra.mxu0 %v360
      %v472 = vpop.f32.mrf.mxu0
      %v473 = vadd.f32 0.0, %v472
      %474 = vmatmul.f32.gmra.mxu0 %v363
      %v475 = vpop.f32.mrf.mxu0
      %v476 = vadd.f32 0.0, %v475
      %477 = vmatmul.f32.gmra.mxu0 %v366
      %v478 = vpop.f32.mrf.mxu0
      %v479 = vadd.f32 0.0, %v478
      %480 = vmatmul.f32.gmra.mxu0 %v369
      %v481 = vpop.f32.mrf.mxu0
      %v482 = vadd.f32 0.0, %v481
      %483 = vmatmul.f32.gmra.mxu0 %v372
      %v484 = vpop.f32.mrf.mxu0
      %v485 = vadd.f32 0.0, %v484
      %486 = vmatmul.f32.gmra.mxu0 %v375
      %v487 = vpop.f32.mrf.mxu0
      %v488 = vadd.f32 0.0, %v487
      %489 = vmatmul.f32.gmra.mxu0 %v378
      %v490 = vpop.f32.mrf.mxu0
      %v491 = vadd.f32 0.0, %v490
      %492 = vmatmul.f32.gmra.mxu0 %v381
      %v493 = vpop.f32.mrf.mxu0
      %v494 = vadd.f32 0.0, %v493
      %495 = vmatmul.f32.gmra.mxu0 %v384
      %v496 = vpop.f32.mrf.mxu0
      %v497 = vadd.f32 0.0, %v496
      %498 = vmatmul.f32.gmra.mxu0 %v387
      %v499 = vpop.f32.mrf.mxu0
      %v500 = vadd.f32 0.0, %v499
      %501 = vdwg.mxu0
      %502 = vmatpush.msra.mxu0 0.0
      %503 = vmatpush.msra.mxu0 0.0
      %504 = vmatpush.msra.mxu0 0.0
      %505 = vmatpush.msra.mxu0 0.0
      %506 = vmatpush.msra.mxu0 0.0
      %507 = vmatpush.msra.mxu0 0.0
      %508 = vmatpush.msra.mxu0 0.0
      %509 = vmatpush.msra.mxu0 0.0
      %510 = vmatpush.msra.mxu0 0.0
      %511 = vmatpush.msra.mxu0 0.0
      %512 = vmatpush.msra.mxu0 0.0
      %513 = vmatpush.msra.mxu0 0.0
      %514 = vmatpush.msra.mxu0 0.0
      %515 = vmatpush.msra.mxu0 0.0
      %516 = vmatpush.msra.mxu0 0.0
      %517 = vmatpush.msra.mxu0 %v289
      %518 = vmatmul.f32.gmra.mxu0 %v294
      %v519 = vpop.f32.mrf.mxu0
      %v520 = vadd.f32 0.0, %v519
      %521 = vmatmul.f32.gmra.mxu0 %v297
      %v522 = vpop.f32.mrf.mxu0
      %v523 = vadd.f32 0.0, %v522
      %524 = vmatmul.f32.gmra.mxu0 %v300
      %v525 = vpop.f32.mrf.mxu0
      %v526 = vadd.f32 0.0, %v525
      %527 = vmatmul.f32.gmra.mxu0 %v303
      %v528 = vpop.f32.mrf.mxu0
      %v529 = vadd.f32 0.0, %v528
      %530 = vmatmul.f32.gmra.mxu0 %v306
      %v531 = vpop.f32.mrf.mxu0
      %v532 = vadd.f32 0.0, %v531
      %533 = vmatmul.f32.gmra.mxu0 %v309
      %v534 = vpop.f32.mrf.mxu0
      %v535 = vadd.f32 0.0, %v534
      %536 = vmatmul.f32.gmra.mxu0 %v312
      %v537 = vpop.f32.mrf.mxu0
      %v538 = vadd.f32 0.0, %v537
      %539 = vmatmul.f32.gmra.mxu0 %v315
      %v540 = vpop.f32.mrf.mxu0
      %v541 = vadd.f32 0.0, %v540
      %542 = vmatmul.f32.gmra.mxu0 %v318
      %v543 = vpop.f32.mrf.mxu0
      %v544 = vadd.f32 0.0, %v543
      %545 = vmatmul.f32.gmra.mxu0 %v321
      %v546 = vpop.f32.mrf.mxu0
      %v547 = vadd.f32 0.0, %v546
      %548 = vmatmul.f32.gmra.mxu0 %v324
      %v549 = vpop.f32.mrf.mxu0
      %v550 = vadd.f32 0.0, %v549
      %551 = vmatmul.f32.gmra.mxu0 %v327
      %v552 = vpop.f32.mrf.mxu0
      %v553 = vadd.f32 0.0, %v552
      %554 = vmatmul.f32.gmra.mxu0 %v330
      %v555 = vpop.f32.mrf.mxu0
      %v556 = vadd.f32 0.0, %v555
      %557 = vmatmul.f32.gmra.mxu0 %v333
      %v558 = vpop.f32.mrf.mxu0
      %v559 = vadd.f32 0.0, %v558
      %560 = vmatmul.f32.gmra.mxu0 %v336
      %v561 = vpop.f32.mrf.mxu0
      %v562 = vadd.f32 0.0, %v561
      %563 = vmatmul.f32.gmra.mxu0 %v339
      %v564 = vpop.f32.mrf.mxu0
      %v565 = vadd.f32 0.0, %v564
      %566 = vmatmul.f32.gmra.mxu0 %v342
      %v567 = vpop.f32.mrf.mxu0
      %v568 = vadd.f32 0.0, %v567
      %569 = vmatmul.f32.gmra.mxu0 %v345
      %v570 = vpop.f32.mrf.mxu0
      %v571 = vadd.f32 0.0, %v570
      %572 = vmatmul.f32.gmra.mxu0 %v348
      %v573 = vpop.f32.mrf.mxu0
      %v574 = vadd.f32 0.0, %v573
      %575 = vmatmul.f32.gmra.mxu0 %v351
      %v576 = vpop.f32.mrf.mxu0
      %v577 = vadd.f32 0.0, %v576
      %578 = vmatmul.f32.gmra.mxu0 %v354
      %v579 = vpop.f32.mrf.mxu0
      %v580 = vadd.f32 0.0, %v579
      %581 = vmatmul.f32.gmra.mxu0 %v357
      %v582 = vpop.f32.mrf.mxu0
      %v583 = vadd.f32 0.0, %v582
      %584 = vmatmul.f32.gmra.mxu0 %v360
      %v585 = vpop.f32.mrf.mxu0
      %v586 = vadd.f32 0.0, %v585
      %587 = vmatmul.f32.gmra.mxu0 %v363
      %v588 = vpop.f32.mrf.mxu0
      %v589 = vadd.f32 0.0, %v588
      %590 = vmatmul.f32.gmra.mxu0 %v366
      %v591 = vpop.f32.mrf.mxu0
      %v592 = vadd.f32 0.0, %v591
      %593 = vmatmul.f32.gmra.mxu0 %v369
      %v594 = vpop.f32.mrf.mxu0
      %v595 = vadd.f32 0.0, %v594
      %596 = vmatmul.f32.gmra.mxu0 %v372
      %v597 = vpop.f32.mrf.mxu0
      %v598 = vadd.f32 0.0, %v597
      %599 = vmatmul.f32.gmra.mxu0 %v375
      %v600 = vpop.f32.mrf.mxu0
      %v601 = vadd.f32 0.0, %v600
      %602 = vmatmul.f32.gmra.mxu0 %v378
      %v603 = vpop.f32.mrf.mxu0
      %v604 = vadd.f32 0.0, %v603
      %605 = vmatmul.f32.gmra.mxu0 %v381
      %v606 = vpop.f32.mrf.mxu0
      %v607 = vadd.f32 0.0, %v606
      %608 = vmatmul.f32.gmra.mxu0 %v384
      %v609 = vpop.f32.mrf.mxu0
      %v610 = vadd.f32 0.0, %v609
      %611 = vmatmul.f32.gmra.mxu0 %v387
      %v612 = vpop.f32.mrf.mxu0
      %v613 = vadd.f32 0.0, %v612
      %614 = vdwg.mxu0
      %615 = vmatpush.msra.mxu0 0.0
      %616 = vmatpush.msra.mxu0 0.0
      %617 = vmatpush.msra.mxu0 0.0
      %618 = vmatpush.msra.mxu0 0.0
      %619 = vmatpush.msra.mxu0 0.0
      %620 = vmatpush.msra.mxu0 0.0
      %621 = vmatpush.msra.mxu0 0.0
      %622 = vmatpush.msra.mxu0 0.0
      %623 = vmatpush.msra.mxu0 0.0
      %624 = vmatpush.msra.mxu0 0.0
      %625 = vmatpush.msra.mxu0 0.0
      %626 = vmatpush.msra.mxu0 0.0
      %627 = vmatpush.msra.mxu0 0.0
      %628 = vmatpush.msra.mxu0 0.0
      %629 = vmatpush.msra.mxu0 0.0
      %630 = vmatpush.msra.mxu0 %v290
      %631 = vmatmul.f32.gmra.mxu0 %v294
      %v632 = vpop.f32.mrf.mxu0
      %v633 = vadd.f32 0.0, %v632
      %634 = vmatmul.f32.gmra.mxu0 %v297
      %v635 = vpop.f32.mrf.mxu0
      %v636 = vadd.f32 0.0, %v635
      %637 = vmatmul.f32.gmra.mxu0 %v300
      %v638 = vpop.f32.mrf.mxu0
      %v639 = vadd.f32 0.0, %v638
      %640 = vmatmul.f32.gmra.mxu0 %v303
      %v641 = vpop.f32.mrf.mxu0
      %v642 = vadd.f32 0.0, %v641
      %643 = vmatmul.f32.gmra.mxu0 %v306
      %v644 = vpop.f32.mrf.mxu0
      %v645 = vadd.f32 0.0, %v644
      %646 = vmatmul.f32.gmra.mxu0 %v309
      %v647 = vpop.f32.mrf.mxu0
      %v648 = vadd.f32 0.0, %v647
      %649 = vmatmul.f32.gmra.mxu0 %v312
      %v650 = vpop.f32.mrf.mxu0
      %v651 = vadd.f32 0.0, %v650
      %652 = vmatmul.f32.gmra.mxu0 %v315
      %v653 = vpop.f32.mrf.mxu0
      %v654 = vadd.f32 0.0, %v653
      %655 = vmatmul.f32.gmra.mxu0 %v318
      %v656 = vpop.f32.mrf.mxu0
      %v657 = vadd.f32 0.0, %v656
      %658 = vmatmul.f32.gmra.mxu0 %v321
      %v659 = vpop.f32.mrf.mxu0
      %v660 = vadd.f32 0.0, %v659
      %661 = vmatmul.f32.gmra.mxu0 %v324
      %v662 = vpop.f32.mrf.mxu0
      %v663 = vadd.f32 0.0, %v662
      %664 = vmatmul.f32.gmra.mxu0 %v327
      %v665 = vpop.f32.mrf.mxu0
      %v666 = vadd.f32 0.0, %v665
      %667 = vmatmul.f32.gmra.mxu0 %v330
      %v668 = vpop.f32.mrf.mxu0
      %v669 = vadd.f32 0.0, %v668
      %670 = vmatmul.f32.gmra.mxu0 %v333
      %v671 = vpop.f32.mrf.mxu0
      %v672 = vadd.f32 0.0, %v671
      %673 = vmatmul.f32.gmra.mxu0 %v336
      %v674 = vpop.f32.mrf.mxu0
      %v675 = vadd.f32 0.0, %v674
      %676 = vmatmul.f32.gmra.mxu0 %v339
      %v677 = vpop.f32.mrf.mxu0
      %v678 = vadd.f32 0.0, %v677
      %679 = vmatmul.f32.gmra.mxu0 %v342
      %v680 = vpop.f32.mrf.mxu0
      %v681 = vadd.f32 0.0, %v680
      %682 = vmatmul.f32.gmra.mxu0 %v345
      %v683 = vpop.f32.mrf.mxu0
      %v684 = vadd.f32 0.0, %v683
      %685 = vmatmul.f32.gmra.mxu0 %v348
      %v686 = vpop.f32.mrf.mxu0
      %v687 = vadd.f32 0.0, %v686
      %688 = vmatmul.f32.gmra.mxu0 %v351
      %v689 = vpop.f32.mrf.mxu0
      %v690 = vadd.f32 0.0, %v689
      %691 = vmatmul.f32.gmra.mxu0 %v354
      %v692 = vpop.f32.mrf.mxu0
      %v693 = vadd.f32 0.0, %v692
      %694 = vmatmul.f32.gmra.mxu0 %v357
      %v695 = vpop.f32.mrf.mxu0
      %v696 = vadd.f32 0.0, %v695
      %697 = vmatmul.f32.gmra.mxu0 %v360
      %v698 = vpop.f32.mrf.mxu0
      %v699 = vadd.f32 0.0, %v698
      %700 = vmatmul.f32.gmra.mxu0 %v363
      %v701 = vpop.f32.mrf.mxu0
      %v702 = vadd.f32 0.0, %v701
      %703 = vmatmul.f32.gmra.mxu0 %v366
      %v704 = vpop.f32.mrf.mxu0
      %v705 = vadd.f32 0.0, %v704
      %706 = vmatmul.f32.gmra.mxu0 %v369
      %v707 = vpop.f32.mrf.mxu0
      %v708 = vadd.f32 0.0, %v707
      %709 = vmatmul.f32.gmra.mxu0 %v372
      %v710 = vpop.f32.mrf.mxu0
      %v711 = vadd.f32 0.0, %v710
      %712 = vmatmul.f32.gmra.mxu0 %v375
      %v713 = vpop.f32.mrf.mxu0
      %v714 = vadd.f32 0.0, %v713
      %715 = vmatmul.f32.gmra.mxu0 %v378
      %v716 = vpop.f32.mrf.mxu0
      %v717 = vadd.f32 0.0, %v716
      %718 = vmatmul.f32.gmra.mxu0 %v381
      %v719 = vpop.f32.mrf.mxu0
      %v720 = vadd.f32 0.0, %v719
      %721 = vmatmul.f32.gmra.mxu0 %v384
      %v722 = vpop.f32.mrf.mxu0
      %v723 = vadd.f32 0.0, %v722
      %724 = vmatmul.f32.gmra.mxu0 %v387
      %v725 = vpop.f32.mrf.mxu0
      %v726 = vadd.f32 0.0, %v725
      %727 = vdwg.mxu0
      %728 = vmatpush.msra.mxu0 0.0
      %729 = vmatpush.msra.mxu0 0.0
      %730 = vmatpush.msra.mxu0 0.0
      %731 = vmatpush.msra.mxu0 0.0
      %732 = vmatpush.msra.mxu0 0.0
      %733 = vmatpush.msra.mxu0 0.0
      %734 = vmatpush.msra.mxu0 0.0
      %735 = vmatpush.msra.mxu0 0.0
      %736 = vmatpush.msra.mxu0 0.0
      %737 = vmatpush.msra.mxu0 0.0
      %738 = vmatpush.msra.mxu0 0.0
      %739 = vmatpush.msra.mxu0 0.0
      %740 = vmatpush.msra.mxu0 0.0
      %741 = vmatpush.msra.mxu0 0.0
      %742 = vmatpush.msra.mxu0 0.0
      %743 = vmatpush.msra.mxu0 %v291
      %744 = vmatmul.f32.gmra.mxu0 %v294
      %v745 = vpop.f32.mrf.mxu0
      %v746 = vadd.f32 0.0, %v745
      %747 = vmatmul.f32.gmra.mxu0 %v297
      %v748 = vpop.f32.mrf.mxu0
      %v749 = vadd.f32 0.0, %v748
      %750 = vmatmul.f32.gmra.mxu0 %v300
      %v751 = vpop.f32.mrf.mxu0
      %v752 = vadd.f32 0.0, %v751
      %753 = vmatmul.f32.gmra.mxu0 %v303
      %v754 = vpop.f32.mrf.mxu0
      %v755 = vadd.f32 0.0, %v754
      %756 = vmatmul.f32.gmra.mxu0 %v306
      %v757 = vpop.f32.mrf.mxu0
      %v758 = vadd.f32 0.0, %v757
      %759 = vmatmul.f32.gmra.mxu0 %v309
      %v760 = vpop.f32.mrf.mxu0
      %v761 = vadd.f32 0.0, %v760
      %762 = vmatmul.f32.gmra.mxu0 %v312
      %v763 = vpop.f32.mrf.mxu0
      %v764 = vadd.f32 0.0, %v763
      %765 = vmatmul.f32.gmra.mxu0 %v315
      %v766 = vpop.f32.mrf.mxu0
      %v767 = vadd.f32 0.0, %v766
      %768 = vmatmul.f32.gmra.mxu0 %v318
      %v769 = vpop.f32.mrf.mxu0
      %v770 = vadd.f32 0.0, %v769
      %771 = vmatmul.f32.gmra.mxu0 %v321
      %v772 = vpop.f32.mrf.mxu0
      %v773 = vadd.f32 0.0, %v772
      %774 = vmatmul.f32.gmra.mxu0 %v324
      %v775 = vpop.f32.mrf.mxu0
      %v776 = vadd.f32 0.0, %v775
      %777 = vmatmul.f32.gmra.mxu0 %v327
      %v778 = vpop.f32.mrf.mxu0
      %v779 = vadd.f32 0.0, %v778
      %780 = vmatmul.f32.gmra.mxu0 %v330
      %v781 = vpop.f32.mrf.mxu0
      %v782 = vadd.f32 0.0, %v781
      %783 = vmatmul.f32.gmra.mxu0 %v333
      %v784 = vpop.f32.mrf.mxu0
      %v785 = vadd.f32 0.0, %v784
      %786 = vmatmul.f32.gmra.mxu0 %v336
      %v787 = vpop.f32.mrf.mxu0
      %v788 = vadd.f32 0.0, %v787
      %789 = vmatmul.f32.gmra.mxu0 %v339
      %v790 = vpop.f32.mrf.mxu0
      %v791 = vadd.f32 0.0, %v790
      %792 = vmatmul.f32.gmra.mxu0 %v342
      %v793 = vpop.f32.mrf.mxu0
      %v794 = vadd.f32 0.0, %v793
      %795 = vmatmul.f32.gmra.mxu0 %v345
      %v796 = vpop.f32.mrf.mxu0
      %v797 = vadd.f32 0.0, %v796
      %798 = vmatmul.f32.gmra.mxu0 %v348
      %v799 = vpop.f32.mrf.mxu0
      %v800 = vadd.f32 0.0, %v799
      %801 = vmatmul.f32.gmra.mxu0 %v351
      %v802 = vpop.f32.mrf.mxu0
      %v803 = vadd.f32 0.0, %v802
      %804 = vmatmul.f32.gmra.mxu0 %v354
      %v805 = vpop.f32.mrf.mxu0
      %v806 = vadd.f32 0.0, %v805
      %807 = vmatmul.f32.gmra.mxu0 %v357
      %v808 = vpop.f32.mrf.mxu0
      %v809 = vadd.f32 0.0, %v808
      %810 = vmatmul.f32.gmra.mxu0 %v360
      %v811 = vpop.f32.mrf.mxu0
      %v812 = vadd.f32 0.0, %v811
      %813 = vmatmul.f32.gmra.mxu0 %v363
      %v814 = vpop.f32.mrf.mxu0
      %v815 = vadd.f32 0.0, %v814
      %816 = vmatmul.f32.gmra.mxu0 %v366
      %v817 = vpop.f32.mrf.mxu0
      %v818 = vadd.f32 0.0, %v817
      %819 = vmatmul.f32.gmra.mxu0 %v369
      %v820 = vpop.f32.mrf.mxu0
      %v821 = vadd.f32 0.0, %v820
      %822 = vmatmul.f32.gmra.mxu0 %v372
      %v823 = vpop.f32.mrf.mxu0
      %v824 = vadd.f32 0.0, %v823
      %825 = vmatmul.f32.gmra.mxu0 %v375
      %v826 = vpop.f32.mrf.mxu0
      %v827 = vadd.f32 0.0, %v826
      %828 = vmatmul.f32.gmra.mxu0 %v378
      %v829 = vpop.f32.mrf.mxu0
      %v830 = vadd.f32 0.0, %v829
      %831 = vmatmul.f32.gmra.mxu0 %v381
      %v832 = vpop.f32.mrf.mxu0
      %v833 = vadd.f32 0.0, %v832
      %834 = vmatmul.f32.gmra.mxu0 %v384
      %v835 = vpop.f32.mrf.mxu0
      %v836 = vadd.f32 0.0, %v835
      %837 = vmatmul.f32.gmra.mxu0 %v387
      %v838 = vpop.f32.mrf.mxu0
      %v839 = vadd.f32 0.0, %v838
      %840 = vdwg.mxu0
      %841 = vst [vmem:[#allocation2] sm:$0xff] %v407
      %842 = vst [vmem:[#allocation2 + $0x8] sm:$0xff] %v520
      %843 = vst [vmem:[#allocation2 + $0x10] sm:$0xff] %v633
      %844 = vst [vmem:[#allocation2 + $0x18] sm:$0xff] %v746
      %845 = vst [vmem:[#allocation2 + $0x20] sm:$0xff] %v410
      %846 = vst [vmem:[#allocation2 + $0x28] sm:$0xff] %v523
      %847 = vst [vmem:[#allocation2 + $0x30] sm:$0xff] %v636
      %848 = vst [vmem:[#allocation2 + $0x38] sm:$0xff] %v749
      %849 = vst [vmem:[#allocation2 + $0x40] sm:$0xff] %v413
      %850 = vst [vmem:[#allocation2 + $0x48] sm:$0xff] %v526
      %851 = vst [vmem:[#allocation2 + $0x50] sm:$0xff] %v639
      %852 = vst [vmem:[#allocation2 + $0x58] sm:$0xff] %v752
      %853 = vst [vmem:[#allocation2 + $0x60] sm:$0xff] %v416
      %854 = vst [vmem:[#allocation2 + $0x68] sm:$0xff] %v529
      %855 = vst [vmem:[#allocation2 + $0x70] sm:$0xff] %v642
      %856 = vst [vmem:[#allocation2 + $0x78] sm:$0xff] %v755
      %857 = vst [vmem:[#allocation2 + $0x80] sm:$0xff] %v419
      %858 = vst [vmem:[#allocation2 + $0x88] sm:$0xff] %v532
      %859 = vst [vmem:[#allocation2 + $0x90] sm:$0xff] %v645
      %860 = vst [vmem:[#allocation2 + $0x98] sm:$0xff] %v758
      %861 = vst [vmem:[#allocation2 + $0xa0] sm:$0xff] %v422
      %862 = vst [vmem:[#allocation2 + $0xa8] sm:$0xff] %v535
      %863 = vst [vmem:[#allocation2 + $0xb0] sm:$0xff] %v648
      %864 = vst [vmem:[#allocation2 + $0xb8] sm:$0xff] %v761
      %865 = vst [vmem:[#allocation2 + $0xc0] sm:$0xff] %v425
      %866 = vst [vmem:[#allocation2 + $0xc8] sm:$0xff] %v538
      %867 = vst [vmem:[#allocation2 + $0xd0] sm:$0xff] %v651
      %868 = vst [vmem:[#allocation2 + $0xd8] sm:$0xff] %v764
      %869 = vst [vmem:[#allocation2 + $0xe0] sm:$0xff] %v428
      %870 = vst [vmem:[#allocation2 + $0xe8] sm:$0xff] %v541
      %871 = vst [vmem:[#allocation2 + $0xf0] sm:$0xff] %v654
      %872 = vst [vmem:[#allocation2 + $0xf8] sm:$0xff] %v767
      %873 = vst [vmem:[#allocation2 + $0x100] sm:$0xff] %v431
      %874 = vst [vmem:[#allocation2 + $0x108] sm:$0xff] %v544
      %875 = vst [vmem:[#allocation2 + $0x110] sm:$0xff] %v657
      %876 = vst [vmem:[#allocation2 + $0x118] sm:$0xff] %v770
      %877 = vst [vmem:[#allocation2 + $0x120] sm:$0xff] %v434
      %878 = vst [vmem:[#allocation2 + $0x128] sm:$0xff] %v547
      %879 = vst [vmem:[#allocation2 + $0x130] sm:$0xff] %v660
      %880 = vst [vmem:[#allocation2 + $0x138] sm:$0xff] %v773
      %881 = vst [vmem:[#allocation2 + $0x140] sm:$0xff] %v437
      %882 = vst [vmem:[#allocation2 + $0x148] sm:$0xff] %v550
      %883 = vst [vmem:[#allocation2 + $0x150] sm:$0xff] %v663
      %884 = vst [vmem:[#allocation2 + $0x158] sm:$0xff] %v776
      %885 = vst [vmem:[#allocation2 + $0x160] sm:$0xff] %v440
      %886 = vst [vmem:[#allocation2 + $0x168] sm:$0xff] %v553
      %887 = vst [vmem:[#allocation2 + $0x170] sm:$0xff] %v666
      %888 = vst [vmem:[#allocation2 + $0x178] sm:$0xff] %v779
      %889 = vst [vmem:[#allocation2 + $0x180] sm:$0xff] %v443
      %890 = vst [vmem:[#allocation2 + $0x188] sm:$0xff] %v556
      %891 = vst [vmem:[#allocation2 + $0x190] sm:$0xff] %v669
      %892 = vst [vmem:[#allocation2 + $0x198] sm:$0xff] %v782
      %893 = vst [vmem:[#allocation2 + $0x1a0] sm:$0xff] %v446
      %894 = vst [vmem:[#allocation2 + $0x1a8] sm:$0xff] %v559
      %895 = vst [vmem:[#allocation2 + $0x1b0] sm:$0xff] %v672
      %896 = vst [vmem:[#allocation2 + $0x1b8] sm:$0xff] %v785
      %897 = vst [vmem:[#allocation2 + $0x1c0] sm:$0xff] %v449
      %898 = vst [vmem:[#allocation2 + $0x1c8] sm:$0xff] %v562
      %899 = vst [vmem:[#allocation2 + $0x1d0] sm:$0xff] %v675
      %900 = vst [vmem:[#allocation2 + $0x1d8] sm:$0xff] %v788
      %901 = vst [vmem:[#allocation2 + $0x1e0] sm:$0xff] %v452
      %902 = vst [vmem:[#allocation2 + $0x1e8] sm:$0xff] %v565
      %903 = vst [vmem:[#allocation2 + $0x1f0] sm:$0xff] %v678
      %904 = vst [vmem:[#allocation2 + $0x1f8] sm:$0xff] %v791
      %905 = vst [vmem:[#allocation2 + $0x200] sm:$0xff] %v455
      %906 = vst [vmem:[#allocation2 + $0x208] sm:$0xff] %v568
      %907 = vst [vmem:[#allocation2 + $0x210] sm:$0xff] %v681
      %908 = vst [vmem:[#allocation2 + $0x218] sm:$0xff] %v794
      %909 = vst [vmem:[#allocation2 + $0x220] sm:$0xff] %v458
      %910 = vst [vmem:[#allocation2 + $0x228] sm:$0xff] %v571
      %911 = vst [vmem:[#allocation2 + $0x230] sm:$0xff] %v684
      %912 = vst [vmem:[#allocation2 + $0x238] sm:$0xff] %v797
      %913 = vst [vmem:[#allocation2 + $0x240] sm:$0xff] %v461
      %914 = vst [vmem:[#allocation2 + $0x248] sm:$0xff] %v574
      %915 = vst [vmem:[#allocation2 + $0x250] sm:$0xff] %v687
      %916 = vst [vmem:[#allocation2 + $0x258] sm:$0xff] %v800
      %917 = vst [vmem:[#allocation2 + $0x260] sm:$0xff] %v464
      %918 = vst [vmem:[#allocation2 + $0x268] sm:$0xff] %v577
      %919 = vst [vmem:[#allocation2 + $0x270] sm:$0xff] %v690
      %920 = vst [vmem:[#allocation2 + $0x278] sm:$0xff] %v803
      %921 = vst [vmem:[#allocation2 + $0x280] sm:$0xff] %v467
      %922 = vst [vmem:[#allocation2 + $0x288] sm:$0xff] %v580
      %923 = vst [vmem:[#allocation2 + $0x290] sm:$0xff] %v693
      %924 = vst [vmem:[#allocation2 + $0x298] sm:$0xff] %v806
      %925 = vst [vmem:[#allocation2 + $0x2a0] sm:$0xff] %v470
      %926 = vst [vmem:[#allocation2 + $0x2a8] sm:$0xff] %v583
      %927 = vst [vmem:[#allocation2 + $0x2b0] sm:$0xff] %v696
      %928 = vst [vmem:[#allocation2 + $0x2b8] sm:$0xff] %v809
      %929 = vst [vmem:[#allocation2 + $0x2c0] sm:$0xff] %v473
      %930 = vst [vmem:[#allocation2 + $0x2c8] sm:$0xff] %v586
      %931 = vst [vmem:[#allocation2 + $0x2d0] sm:$0xff] %v699
      %932 = vst [vmem:[#allocation2 + $0x2d8] sm:$0xff] %v812
      %933 = vst [vmem:[#allocation2 + $0x2e0] sm:$0xff] %v476
      %934 = vst [vmem:[#allocation2 + $0x2e8] sm:$0xff] %v589
      %935 = vst [vmem:[#allocation2 + $0x2f0] sm:$0xff] %v702
      %936 = vst [vmem:[#allocation2 + $0x2f8] sm:$0xff] %v815
      %937 = vst [vmem:[#allocation2 + $0x300] sm:$0xff] %v479
      %938 = vst [vmem:[#allocation2 + $0x308] sm:$0xff] %v592
      %939 = vst [vmem:[#allocation2 + $0x310] sm:$0xff] %v705
      %940 = vst [vmem:[#allocation2 + $0x318] sm:$0xff] %v818
      %941 = vst [vmem:[#allocation2 + $0x320] sm:$0xff] %v482
      %942 = vst [vmem:[#allocation2 + $0x328] sm:$0xff] %v595
      %943 = vst [vmem:[#allocation2 + $0x330] sm:$0xff] %v708
      %944 = vst [vmem:[#allocation2 + $0x338] sm:$0xff] %v821
      %945 = vst [vmem:[#allocation2 + $0x340] sm:$0xff] %v485
      %946 = vst [vmem:[#allocation2 + $0x348] sm:$0xff] %v598
      %947 = vst [vmem:[#allocation2 + $0x350] sm:$0xff] %v711
      %948 = vst [vmem:[#allocation2 + $0x358] sm:$0xff] %v824
      %949 = vst [vmem:[#allocation2 + $0x360] sm:$0xff] %v488
      %950 = vst [vmem:[#allocation2 + $0x368] sm:$0xff] %v601
      %951 = vst [vmem:[#allocation2 + $0x370] sm:$0xff] %v714
      %952 = vst [vmem:[#allocation2 + $0x378] sm:$0xff] %v827
      %953 = vst [vmem:[#allocation2 + $0x380] sm:$0xff] %v491
      %954 = vst [vmem:[#allocation2 + $0x388] sm:$0xff] %v604
      %955 = vst [vmem:[#allocation2 + $0x390] sm:$0xff] %v717
      %956 = vst [vmem:[#allocation2 + $0x398] sm:$0xff] %v830
      %957 = vst [vmem:[#allocation2 + $0x3a0] sm:$0xff] %v494
      %958 = vst [vmem:[#allocation2 + $0x3a8] sm:$0xff] %v607
      %959 = vst [vmem:[#allocation2 + $0x3b0] sm:$0xff] %v720
      %960 = vst [vmem:[#allocation2 + $0x3b8] sm:$0xff] %v833
      %961 = vst [vmem:[#allocation2 + $0x3c0] sm:$0xff] %v497
      %962 = vst [vmem:[#allocation2 + $0x3c8] sm:$0xff] %v610
      %963 = vst [vmem:[#allocation2 + $0x3d0] sm:$0xff] %v723
      %964 = vst [vmem:[#allocation2 + $0x3d8] sm:$0xff] %v836
      %965 = vst [vmem:[#allocation2 + $0x3e0] sm:$0xff] %v500
      %966 = vst [vmem:[#allocation2 + $0x3e8] sm:$0xff] %v613
      %967 = vst [vmem:[#allocation2 + $0x3f0] sm:$0xff] %v726
      %968 = vst [vmem:[#allocation2 + $0x3f8] sm:$0xff] %v839
      %v969 = vld [vmem:[#allocation2] sm:$0xff]
      %v970 = vld [vmem:[#allocation2 + $0x20] sm:$0xff]
      %v971 = vld [vmem:[#allocation2 + $0x40] sm:$0xff]
      %v972 = vld [vmem:[#allocation2 + $0x60] sm:$0xff]
      %v973 = vld [vmem:[#allocation2 + $0x80] sm:$0xff]
      %v974 = vld [vmem:[#allocation2 + $0xa0] sm:$0xff]
      %v975 = vld [vmem:[#allocation2 + $0xc0] sm:$0xff]
      %v976 = vld [vmem:[#allocation2 + $0xe0] sm:$0xff]
      %v977 = vld [vmem:[#allocation2 + $0x100] sm:$0xff]
      %v978 = vld [vmem:[#allocation2 + $0x120] sm:$0xff]
      %v979 = vld [vmem:[#allocation2 + $0x140] sm:$0xff]
      %v980 = vld [vmem:[#allocation2 + $0x160] sm:$0xff]
      %v981 = vld [vmem:[#allocation2 + $0x180] sm:$0xff]
      %v982 = vld [vmem:[#allocation2 + $0x1a0] sm:$0xff]
      %v983 = vld [vmem:[#allocation2 + $0x1c0] sm:$0xff]
      %v984 = vld [vmem:[#allocation2 + $0x1e0] sm:$0xff]
      %v985 = vld [vmem:[#allocation2 + $0x200] sm:$0xff]
      %v986 = vld [vmem:[#allocation2 + $0x220] sm:$0xff]
      %v987 = vld [vmem:[#allocation2 + $0x240] sm:$0xff]
      %v988 = vld [vmem:[#allocation2 + $0x260] sm:$0xff]
      %v989 = vld [vmem:[#allocation2 + $0x280] sm:$0xff]
      %v990 = vld [vmem:[#allocation2 + $0x2a0] sm:$0xff]
      %v991 = vld [vmem:[#allocation2 + $0x2c0] sm:$0xff]
      %v992 = vld [vmem:[#allocation2 + $0x2e0] sm:$0xff]
      %v993 = vld [vmem:[#allocation2 + $0x300] sm:$0xff]
      %v994 = vld [vmem:[#allocation2 + $0x320] sm:$0xff]
      %v995 = vld [vmem:[#allocation2 + $0x340] sm:$0xff]
      %v996 = vld [vmem:[#allocation2 + $0x360] sm:$0xff]
      %v997 = vld [vmem:[#allocation2 + $0x380] sm:$0xff]
      %v998 = vld [vmem:[#allocation2 + $0x3a0] sm:$0xff]
      %v999 = vld [vmem:[#allocation2 + $0x3c0] sm:$0xff]
      %v1000 = vld [vmem:[#allocation2 + $0x3e0] sm:$0xff]
      %v1001 = vld [vmem:[#allocation2 + $0x8] sm:$0xff]
      %v1002 = vld [vmem:[#allocation2 + $0x28] sm:$0xff]
      %v1003 = vld [vmem:[#allocation2 + $0x48] sm:$0xff]
      %v1004 = vld [vmem:[#allocation2 + $0x68] sm:$0xff]
      %v1005 = vld [vmem:[#allocation2 + $0x88] sm:$0xff]
      %v1006 = vld [vmem:[#allocation2 + $0xa8] sm:$0xff]
      %v1007 = vld [vmem:[#allocation2 + $0xc8] sm:$0xff]
      %v1008 = vld [vmem:[#allocation2 + $0xe8] sm:$0xff]
      %v1009 = vld [vmem:[#allocation2 + $0x108] sm:$0xff]
      %v1010 = vld [vmem:[#allocation2 + $0x128] sm:$0xff]
      %v1011 = vld [vmem:[#allocation2 + $0x148] sm:$0xff]
      %v1012 = vld [vmem:[#allocation2 + $0x168] sm:$0xff]
      %v1013 = vld [vmem:[#allocation2 + $0x188] sm:$0xff]
      %v1014 = vld [vmem:[#allocation2 + $0x1a8] sm:$0xff]
      %v1015 = vld [vmem:[#allocation2 + $0x1c8] sm:$0xff]
      %v1016 = vld [vmem:[#allocation2 + $0x1e8] sm:$0xff]
      %v1017 = vld [vmem:[#allocation2 + $0x208] sm:$0xff]
      %v1018 = vld [vmem:[#allocation2 + $0x228] sm:$0xff]
      %v1019 = vld [vmem:[#allocation2 + $0x248] sm:$0xff]
      %v1020 = vld [vmem:[#allocation2 + $0x268] sm:$0xff]
      %v1021 = vld [vmem:[#allocation2 + $0x288] sm:$0xff]
      %v1022 = vld [vmem:[#allocation2 + $0x2a8] sm:$0xff]
      %v1023 = vld [vmem:[#allocation2 + $0x2c8] sm:$0xff]
      %v1024 = vld [vmem:[#allocation2 + $0x2e8] sm:$0xff]
      %v1025 = vld [vmem:[#allocation2 + $0x308] sm:$0xff]
      %v1026 = vld [vmem:[#allocation2 + $0x328] sm:$0xff]
      %v1027 = vld [vmem:[#allocation2 + $0x348] sm:$0xff]
      %v1028 = vld [vmem:[#allocation2 + $0x368] sm:$0xff]
      %v1029 = vld [vmem:[#allocation2 + $0x388] sm:$0xff]
      %v1030 = vld [vmem:[#allocation2 + $0x3a8] sm:$0xff]
      %v1031 = vld [vmem:[#allocation2 + $0x3c8] sm:$0xff]
      %v1032 = vld [vmem:[#allocation2 + $0x3e8] sm:$0xff]
      %v1033 = vmin.f32 %v969, %v1001
      %v1034 = vmin.f32 %v970, %v1002
      %v1035 = vmin.f32 %v971, %v1003
      %v1036 = vmin.f32 %v972, %v1004
      %v1037 = vmin.f32 %v973, %v1005
      %v1038 = vmin.f32 %v974, %v1006
      %v1039 = vmin.f32 %v975, %v1007
      %v1040 = vmin.f32 %v976, %v1008
      %v1041 = vmin.f32 %v977, %v1009
      %v1042 = vmin.f32 %v978, %v1010
      %v1043 = vmin.f32 %v979, %v1011
      %v1044 = vmin.f32 %v980, %v1012
      %v1045 = vmin.f32 %v981, %v1013
      %v1046 = vmin.f32 %v982, %v1014
      %v1047 = vmin.f32 %v983, %v1015
      %v1048 = vmin.f32 %v984, %v1016
      %v1049 = vmin.f32 %v985, %v1017
      %v1050 = vmin.f32 %v986, %v1018
      %v1051 = vmin.f32 %v987, %v1019
      %v1052 = vmin.f32 %v988, %v1020
      %v1053 = vmin.f32 %v989, %v1021
      %v1054 = vmin.f32 %v990, %v1022
      %v1055 = vmin.f32 %v991, %v1023
      %v1056 = vmin.f32 %v992, %v1024
      %v1057 = vmin.f32 %v993, %v1025
      %v1058 = vmin.f32 %v994, %v1026
      %v1059 = vmin.f32 %v995, %v1027
      %v1060 = vmin.f32 %v996, %v1028
      %v1061 = vmin.f32 %v997, %v1029
      %v1062 = vmin.f32 %v998, %v1030
      %v1063 = vmin.f32 %v999, %v1031
      %v1064 = vmin.f32 %v1000, %v1032
      %v1065 = vld [vmem:[#allocation2 + $0x10] sm:$0xff]
      %v1066 = vld [vmem:[#allocation2 + $0x30] sm:$0xff]
      %v1067 = vld [vmem:[#allocation2 + $0x50] sm:$0xff]
      %v1068 = vld [vmem:[#allocation2 + $0x70] sm:$0xff]
      %v1069 = vld [vmem:[#allocation2 + $0x90] sm:$0xff]
      %v1070 = vld [vmem:[#allocation2 + $0xb0] sm:$0xff]
      %v1071 = vld [vmem:[#allocation2 + $0xd0] sm:$0xff]
      %v1072 = vld [vmem:[#allocation2 + $0xf0] sm:$0xff]
      %v1073 = vld [vmem:[#allocation2 + $0x110] sm:$0xff]
      %v1074 = vld [vmem:[#allocation2 + $0x130] sm:$0xff]
      %v1075 = vld [vmem:[#allocation2 + $0x150] sm:$0xff]
      %v1076 = vld [vmem:[#allocation2 + $0x170] sm:$0xff]
      %v1077 = vld [vmem:[#allocation2 + $0x190] sm:$0xff]
      %v1078 = vld [vmem:[#allocation2 + $0x1b0] sm:$0xff]
      %v1079 = vld [vmem:[#allocation2 + $0x1d0] sm:$0xff]
      %v1080 = vld [vmem:[#allocation2 + $0x1f0] sm:$0xff]
      %v1081 = vld [vmem:[#allocation2 + $0x210] sm:$0xff]
      %v1082 = vld [vmem:[#allocation2 + $0x230] sm:$0xff]
      %v1083 = vld [vmem:[#allocation2 + $0x250] sm:$0xff]
      %v1084 = vld [vmem:[#allocation2 + $0x270] sm:$0xff]
      %v1085 = vld [vmem:[#allocation2 + $0x290] sm:$0xff]
      %v1086 = vld [vmem:[#allocation2 + $0x2b0] sm:$0xff]
      %v1087 = vld [vmem:[#allocation2 + $0x2d0] sm:$0xff]
      %v1088 = vld [vmem:[#allocation2 + $0x2f0] sm:$0xff]
      %v1089 = vld [vmem:[#allocation2 + $0x310] sm:$0xff]
      %v1090 = vld [vmem:[#allocation2 + $0x330] sm:$0xff]
      %v1091 = vld [vmem:[#allocation2 + $0x350] sm:$0xff]
      %v1092 = vld [vmem:[#allocation2 + $0x370] sm:$0xff]
      %v1093 = vld [vmem:[#allocation2 + $0x390] sm:$0xff]
      %v1094 = vld [vmem:[#allocation2 + $0x3b0] sm:$0xff]
      %v1095 = vld [vmem:[#allocation2 + $0x3d0] sm:$0xff]
      %v1096 = vld [vmem:[#allocation2 + $0x3f0] sm:$0xff]
      %v1097 = vmin.f32 %v1033, %v1065
      %v1098 = vmin.f32 %v1034, %v1066
      %v1099 = vmin.f32 %v1035, %v1067
      %v1100 = vmin.f32 %v1036, %v1068
      %v1101 = vmin.f32 %v1037, %v1069
      %v1102 = vmin.f32 %v1038, %v1070
      %v1103 = vmin.f32 %v1039, %v1071
      %v1104 = vmin.f32 %v1040, %v1072
      %v1105 = vmin.f32 %v1041, %v1073
      %v1106 = vmin.f32 %v1042, %v1074
      %v1107 = vmin.f32 %v1043, %v1075
      %v1108 = vmin.f32 %v1044, %v1076
      %v1109 = vmin.f32 %v1045, %v1077
      %v1110 = vmin.f32 %v1046, %v1078
      %v1111 = vmin.f32 %v1047, %v1079
      %v1112 = vmin.f32 %v1048, %v1080
      %v1113 = vmin.f32 %v1049, %v1081
      %v1114 = vmin.f32 %v1050, %v1082
      %v1115 = vmin.f32 %v1051, %v1083
      %v1116 = vmin.f32 %v1052, %v1084
      %v1117 = vmin.f32 %v1053, %v1085
      %v1118 = vmin.f32 %v1054, %v1086
      %v1119 = vmin.f32 %v1055, %v1087
      %v1120 = vmin.f32 %v1056, %v1088
      %v1121 = vmin.f32 %v1057, %v1089
      %v1122 = vmin.f32 %v1058, %v1090
      %v1123 = vmin.f32 %v1059, %v1091
      %v1124 = vmin.f32 %v1060, %v1092
      %v1125 = vmin.f32 %v1061, %v1093
      %v1126 = vmin.f32 %v1062, %v1094
      %v1127 = vmin.f32 %v1063, %v1095
      %v1128 = vmin.f32 %v1064, %v1096
      %v1129 = vld [vmem:[#allocation2 + $0x18] sm:$0xff]
      %v1130 = vld [vmem:[#allocation2 + $0x38] sm:$0xff]
      %v1131 = vld [vmem:[#allocation2 + $0x58] sm:$0xff]
      %v1132 = vld [vmem:[#allocation2 + $0x78] sm:$0xff]
      %v1133 = vld [vmem:[#allocation2 + $0x98] sm:$0xff]
      %v1134 = vld [vmem:[#allocation2 + $0xb8] sm:$0xff]
      %v1135 = vld [vmem:[#allocation2 + $0xd8] sm:$0xff]
      %v1136 = vld [vmem:[#allocation2 + $0xf8] sm:$0xff]
      %v1137 = vld [vmem:[#allocation2 + $0x118] sm:$0xff]
      %v1138 = vld [vmem:[#allocation2 + $0x138] sm:$0xff]
      %v1139 = vld [vmem:[#allocation2 + $0x158] sm:$0xff]
      %v1140 = vld [vmem:[#allocation2 + $0x178] sm:$0xff]
      %v1141 = vld [vmem:[#allocation2 + $0x198] sm:$0xff]
      %v1142 = vld [vmem:[#allocation2 + $0x1b8] sm:$0xff]
      %v1143 = vld [vmem:[#allocation2 + $0x1d8] sm:$0xff]
      %v1144 = vld [vmem:[#allocation2 + $0x1f8] sm:$0xff]
      %v1145 = vld [vmem:[#allocation2 + $0x218] sm:$0xff]
      %v1146 = vld [vmem:[#allocation2 + $0x238] sm:$0xff]
      %v1147 = vld [vmem:[#allocation2 + $0x258] sm:$0xff]
      %v1148 = vld [vmem:[#allocation2 + $0x278] sm:$0xff]
      %v1149 = vld [vmem:[#allocation2 + $0x298] sm:$0xff]
      %v1150 = vld [vmem:[#allocation2 + $0x2b8] sm:$0xff]
      %v1151 = vld [vmem:[#allocation2 + $0x2d8] sm:$0xff]
      %v1152 = vld [vmem:[#allocation2 + $0x2f8] sm:$0xff]
      %v1153 = vld [vmem:[#allocation2 + $0x318] sm:$0xff]
      %v1154 = vld [vmem:[#allocation2 + $0x338] sm:$0xff]
      %v1155 = vld [vmem:[#allocation2 + $0x358] sm:$0xff]
      %v1156 = vld [vmem:[#allocation2 + $0x378] sm:$0xff]
      %v1157 = vld [vmem:[#allocation2 + $0x398] sm:$0xff]
      %v1158 = vld [vmem:[#allocation2 + $0x3b8] sm:$0xff]
      %v1159 = vld [vmem:[#allocation2 + $0x3d8] sm:$0xff]
      %v1160 = vld [vmem:[#allocation2 + $0x3f8] sm:$0xff]
      %v1161 = vmin.f32 %v1097, %v1129
      %v1162 = vmin.f32 %v1098, %v1130
      %v1163 = vmin.f32 %v1099, %v1131
      %v1164 = vmin.f32 %v1100, %v1132
      %v1165 = vmin.f32 %v1101, %v1133
      %v1166 = vmin.f32 %v1102, %v1134
      %v1167 = vmin.f32 %v1103, %v1135
      %v1168 = vmin.f32 %v1104, %v1136
      %v1169 = vmin.f32 %v1105, %v1137
      %v1170 = vmin.f32 %v1106, %v1138
      %v1171 = vmin.f32 %v1107, %v1139
      %v1172 = vmin.f32 %v1108, %v1140
      %v1173 = vmin.f32 %v1109, %v1141
      %v1174 = vmin.f32 %v1110, %v1142
      %v1175 = vmin.f32 %v1111, %v1143
      %v1176 = vmin.f32 %v1112, %v1144
      %v1177 = vmin.f32 %v1113, %v1145
      %v1178 = vmin.f32 %v1114, %v1146
      %v1179 = vmin.f32 %v1115, %v1147
      %v1180 = vmin.f32 %v1116, %v1148
      %v1181 = vmin.f32 %v1117, %v1149
      %v1182 = vmin.f32 %v1118, %v1150
      %v1183 = vmin.f32 %v1119, %v1151
      %v1184 = vmin.f32 %v1120, %v1152
      %v1185 = vmin.f32 %v1121, %v1153
      %v1186 = vmin.f32 %v1122, %v1154
      %v1187 = vmin.f32 %v1123, %v1155
      %v1188 = vmin.f32 %v1124, %v1156
      %v1189 = vmin.f32 %v1125, %v1157
      %v1190 = vmin.f32 %v1126, %v1158
      %v1191 = vmin.f32 %v1127, %v1159
      %v1192 = vmin.f32 %v1128, %v1160
      // Predicated region
      $region33: #{tpu_custom_call.1} parent=27 // pred_check
        %p1193 = pneg %p248
      $region34: #{tpu_custom_call.1} parent=27 // pred_check_branch
        %1195 = sbr.rel (%p1193) target = $region36
      $region35: #{tpu_custom_call.1} parent=27 // pred_region
        %1196 = vst [vmem:[#allocation3] sm:$0xff] %v1161
        %1197 = vst [vmem:[#allocation3 + $0x8] sm:$0xff] %v1162
        %1198 = vst [vmem:[#allocation3 + $0x10] sm:$0xff] %v1163
        %1199 = vst [vmem:[#allocation3 + $0x18] sm:$0xff] %v1164
        %1200 = vst [vmem:[#allocation3 + $0x20] sm:$0xff] %v1165
        %1201 = vst [vmem:[#allocation3 + $0x28] sm:$0xff] %v1166
        %1202 = vst [vmem:[#allocation3 + $0x30] sm:$0xff] %v1167
        %1203 = vst [vmem:[#allocation3 + $0x38] sm:$0xff] %v1168
        %1204 = vst [vmem:[#allocation3 + $0x40] sm:$0xff] %v1169
        %1205 = vst [vmem:[#allocation3 + $0x48] sm:$0xff] %v1170
        %1206 = vst [vmem:[#allocation3 + $0x50] sm:$0xff] %v1171
        %1207 = vst [vmem:[#allocation3 + $0x58] sm:$0xff] %v1172
        %1208 = vst [vmem:[#allocation3 + $0x60] sm:$0xff] %v1173
        %1209 = vst [vmem:[#allocation3 + $0x68] sm:$0xff] %v1174
        %1210 = vst [vmem:[#allocation3 + $0x70] sm:$0xff] %v1175
        %1211 = vst [vmem:[#allocation3 + $0x78] sm:$0xff] %v1176
        %1212 = vst [vmem:[#allocation3 + $0x80] sm:$0xff] %v1177
        %1213 = vst [vmem:[#allocation3 + $0x88] sm:$0xff] %v1178
        %1214 = vst [vmem:[#allocation3 + $0x90] sm:$0xff] %v1179
        %1215 = vst [vmem:[#allocation3 + $0x98] sm:$0xff] %v1180
        %1216 = vst [vmem:[#allocation3 + $0xa0] sm:$0xff] %v1181
        %1217 = vst [vmem:[#allocation3 + $0xa8] sm:$0xff] %v1182
        %1218 = vst [vmem:[#allocation3 + $0xb0] sm:$0xff] %v1183
        %1219 = vst [vmem:[#allocation3 + $0xb8] sm:$0xff] %v1184
        %1220 = vst [vmem:[#allocation3 + $0xc0] sm:$0xff] %v1185
        %1221 = vst [vmem:[#allocation3 + $0xc8] sm:$0xff] %v1186
        %1222 = vst [vmem:[#allocation3 + $0xd0] sm:$0xff] %v1187
        %1223 = vst [vmem:[#allocation3 + $0xd8] sm:$0xff] %v1188
        %1224 = vst [vmem:[#allocation3 + $0xe0] sm:$0xff] %v1189
        %1225 = vst [vmem:[#allocation3 + $0xe8] sm:$0xff] %v1190
        %1226 = vst [vmem:[#allocation3 + $0xf0] sm:$0xff] %v1191
        %1227 = vst [vmem:[#allocation3 + $0xf8] sm:$0xff] %v1192
      $region36: #{tpu_custom_call.1} parent=27 // pred_fallthru
        _
      %p1228 = scmp.gt.s32.totalorder %s22, 0
      // Predicated region
      $region37: #{tpu_custom_call.1} parent=27 // pred_check
        %p1229 = pneg %p1228
      $region38: #{tpu_custom_call.1} parent=27 // pred_check_branch
        %1231 = sbr.rel (%p1229) target = $region40
      $region39: #{tpu_custom_call.1} parent=27 // pred_region
        %v1232 = vld [vmem:[#allocation3] sm:$0xff]
        %v1233 = vld [vmem:[#allocation3 + $0x8] sm:$0xff]
        %v1234 = vld [vmem:[#allocation3 + $0x10] sm:$0xff]
        %v1235 = vld [vmem:[#allocation3 + $0x18] sm:$0xff]
        %v1236 = vld [vmem:[#allocation3 + $0x20] sm:$0xff]
        %v1237 = vld [vmem:[#allocation3 + $0x28] sm:$0xff]
        %v1238 = vld [vmem:[#allocation3 + $0x30] sm:$0xff]
        %v1239 = vld [vmem:[#allocation3 + $0x38] sm:$0xff]
        %v1240 = vld [vmem:[#allocation3 + $0x40] sm:$0xff]
        %v1241 = vld [vmem:[#allocation3 + $0x48] sm:$0xff]
        %v1242 = vld [vmem:[#allocation3 + $0x50] sm:$0xff]
        %v1243 = vld [vmem:[#allocation3 + $0x58] sm:$0xff]
        %v1244 = vld [vmem:[#allocation3 + $0x60] sm:$0xff]
        %v1245 = vld [vmem:[#allocation3 + $0x68] sm:$0xff]
        %v1246 = vld [vmem:[#allocation3 + $0x70] sm:$0xff]
        %v1247 = vld [vmem:[#allocation3 + $0x78] sm:$0xff]
        %v1248 = vld [vmem:[#allocation3 + $0x80] sm:$0xff]
        %v1249 = vld [vmem:[#allocation3 + $0x88] sm:$0xff]
        %v1250 = vld [vmem:[#allocation3 + $0x90] sm:$0xff]
        %v1251 = vld [vmem:[#allocation3 + $0x98] sm:$0xff]
        %v1252 = vld [vmem:[#allocation3 + $0xa0] sm:$0xff]
        %v1253 = vld [vmem:[#allocation3 + $0xa8] sm:$0xff]
        %v1254 = vld [vmem:[#allocation3 + $0xb0] sm:$0xff]
        %v1255 = vld [vmem:[#allocation3 + $0xb8] sm:$0xff]
        %v1256 = vld [vmem:[#allocation3 + $0xc0] sm:$0xff]
        %v1257 = vld [vmem:[#allocation3 + $0xc8] sm:$0xff]
        %v1258 = vld [vmem:[#allocation3 + $0xd0] sm:$0xff]
        %v1259 = vld [vmem:[#allocation3 + $0xd8] sm:$0xff]
        %v1260 = vld [vmem:[#allocation3 + $0xe0] sm:$0xff]
        %v1261 = vld [vmem:[#allocation3 + $0xe8] sm:$0xff]
        %v1262 = vld [vmem:[#allocation3 + $0xf0] sm:$0xff]
        %v1263 = vld [vmem:[#allocation3 + $0xf8] sm:$0xff]
        %v1264 = vmin.f32 %v1232, %v1161
        %v1265 = vmin.f32 %v1233, %v1162
        %v1266 = vmin.f32 %v1234, %v1163
        %v1267 = vmin.f32 %v1235, %v1164
        %v1268 = vmin.f32 %v1236, %v1165
        %v1269 = vmin.f32 %v1237, %v1166
        %v1270 = vmin.f32 %v1238, %v1167
        %v1271 = vmin.f32 %v1239, %v1168
        %v1272 = vmin.f32 %v1240, %v1169
        %v1273 = vmin.f32 %v1241, %v1170
        %v1274 = vmin.f32 %v1242, %v1171
        %v1275 = vmin.f32 %v1243, %v1172
        %v1276 = vmin.f32 %v1244, %v1173
        %v1277 = vmin.f32 %v1245, %v1174
        %v1278 = vmin.f32 %v1246, %v1175
        %v1279 = vmin.f32 %v1247, %v1176
        %v1280 = vmin.f32 %v1248, %v1177
        %v1281 = vmin.f32 %v1249, %v1178
        %v1282 = vmin.f32 %v1250, %v1179
        %v1283 = vmin.f32 %v1251, %v1180
        %v1284 = vmin.f32 %v1252, %v1181
        %v1285 = vmin.f32 %v1253, %v1182
        %v1286 = vmin.f32 %v1254, %v1183
        %v1287 = vmin.f32 %v1255, %v1184
        %v1288 = vmin.f32 %v1256, %v1185
        %v1289 = vmin.f32 %v1257, %v1186
        %v1290 = vmin.f32 %v1258, %v1187
        %v1291 = vmin.f32 %v1259, %v1188
        %v1292 = vmin.f32 %v1260, %v1189
        %v1293 = vmin.f32 %v1261, %v1190
        %v1294 = vmin.f32 %v1262, %v1191
        %v1295 = vmin.f32 %v1263, %v1192
        %1296 = vst [vmem:[#allocation3] sm:$0xff] %v1264
        %1297 = vst [vmem:[#allocation3 + $0x8] sm:$0xff] %v1265
        %1298 = vst [vmem:[#allocation3 + $0x10] sm:$0xff] %v1266
        %1299 = vst [vmem:[#allocation3 + $0x18] sm:$0xff] %v1267
        %1300 = vst [vmem:[#allocation3 + $0x20] sm:$0xff] %v1268
        %1301 = vst [vmem:[#allocation3 + $0x28] sm:$0xff] %v1269
        %1302 = vst [vmem:[#allocation3 + $0x30] sm:$0xff] %v1270
        %1303 = vst [vmem:[#allocation3 + $0x38] sm:$0xff] %v1271
        %1304 = vst [vmem:[#allocation3 + $0x40] sm:$0xff] %v1272
        %1305 = vst [vmem:[#allocation3 + $0x48] sm:$0xff] %v1273
        %1306 = vst [vmem:[#allocation3 + $0x50] sm:$0xff] %v1274
        %1307 = vst [vmem:[#allocation3 + $0x58] sm:$0xff] %v1275
        %1308 = vst [vmem:[#allocation3 + $0x60] sm:$0xff] %v1276
        %1309 = vst [vmem:[#allocation3 + $0x68] sm:$0xff] %v1277
        %1310 = vst [vmem:[#allocation3 + $0x70] sm:$0xff] %v1278
        %1311 = vst [vmem:[#allocation3 + $0x78] sm:$0xff] %v1279
        %1312 = vst [vmem:[#allocation3 + $0x80] sm:$0xff] %v1280
        %1313 = vst [vmem:[#allocation3 + $0x88] sm:$0xff] %v1281
        %1314 = vst [vmem:[#allocation3 + $0x90] sm:$0xff] %v1282
        %1315 = vst [vmem:[#allocation3 + $0x98] sm:$0xff] %v1283
        %1316 = vst [vmem:[#allocation3 + $0xa0] sm:$0xff] %v1284
        %1317 = vst [vmem:[#allocation3 + $0xa8] sm:$0xff] %v1285
        %1318 = vst [vmem:[#allocation3 + $0xb0] sm:$0xff] %v1286
        %1319 = vst [vmem:[#allocation3 + $0xb8] sm:$0xff] %v1287
        %1320 = vst [vmem:[#allocation3 + $0xc0] sm:$0xff] %v1288
        %1321 = vst [vmem:[#allocation3 + $0xc8] sm:$0xff] %v1289
        %1322 = vst [vmem:[#allocation3 + $0xd0] sm:$0xff] %v1290
        %1323 = vst [vmem:[#allocation3 + $0xd8] sm:$0xff] %v1291
        %1324 = vst [vmem:[#allocation3 + $0xe0] sm:$0xff] %v1292
        %1325 = vst [vmem:[#allocation3 + $0xe8] sm:$0xff] %v1293
        %1326 = vst [vmem:[#allocation3 + $0xf0] sm:$0xff] %v1294
        %1327 = vst [vmem:[#allocation3 + $0xf8] sm:$0xff] %v1295
      $region40: #{tpu_custom_call.1} parent=27 // pred_fallthru
        _
      %p1328 = scmp.eq.s32.totalorder %s22, 1
      // Predicated region
      $region41: #{tpu_custom_call.1} parent=27 // pred_check
        %p1329 = pneg %p1328
      $region42: #{tpu_custom_call.1} parent=27 // pred_check_branch
        %1331 = sbr.rel (%p1329) target = $region44
      $region43: #{tpu_custom_call.1} parent=27 // pred_region
        %v1332 = vld [vmem:[#allocation3] sm:$0xff]
        %v1333 = vld [vmem:[#allocation3 + $0x8] sm:$0xff]
        %v1334 = vld [vmem:[#allocation3 + $0x10] sm:$0xff]
        %v1335 = vld [vmem:[#allocation3 + $0x18] sm:$0xff]
        %v1336 = vld [vmem:[#allocation3 + $0x20] sm:$0xff]
        %v1337 = vld [vmem:[#allocation3 + $0x28] sm:$0xff]
        %v1338 = vld [vmem:[#allocation3 + $0x30] sm:$0xff]
        %v1339 = vld [vmem:[#allocation3 + $0x38] sm:$0xff]
        %v1340 = vld [vmem:[#allocation3 + $0x40] sm:$0xff]
        %v1341 = vld [vmem:[#allocation3 + $0x48] sm:$0xff]
        %v1342 = vld [vmem:[#allocation3 + $0x50] sm:$0xff]
        %v1343 = vld [vmem:[#allocation3 + $0x58] sm:$0xff]
        %v1344 = vld [vmem:[#allocation3 + $0x60] sm:$0xff]
        %v1345 = vld [vmem:[#allocation3 + $0x68] sm:$0xff]
        %v1346 = vld [vmem:[#allocation3 + $0x70] sm:$0xff]
        %v1347 = vld [vmem:[#allocation3 + $0x78] sm:$0xff]
        %v1348 = vld [vmem:[#allocation3 + $0x80] sm:$0xff]
        %v1349 = vld [vmem:[#allocation3 + $0x88] sm:$0xff]
        %v1350 = vld [vmem:[#allocation3 + $0x90] sm:$0xff]
        %v1351 = vld [vmem:[#allocation3 + $0x98] sm:$0xff]
        %v1352 = vld [vmem:[#allocation3 + $0xa0] sm:$0xff]
        %v1353 = vld [vmem:[#allocation3 + $0xa8] sm:$0xff]
        %v1354 = vld [vmem:[#allocation3 + $0xb0] sm:$0xff]
        %v1355 = vld [vmem:[#allocation3 + $0xb8] sm:$0xff]
        %v1356 = vld [vmem:[#allocation3 + $0xc0] sm:$0xff]
        %v1357 = vld [vmem:[#allocation3 + $0xc8] sm:$0xff]
        %v1358 = vld [vmem:[#allocation3 + $0xd0] sm:$0xff]
        %v1359 = vld [vmem:[#allocation3 + $0xd8] sm:$0xff]
        %v1360 = vld [vmem:[#allocation3 + $0xe0] sm:$0xff]
        %v1361 = vld [vmem:[#allocation3 + $0xe8] sm:$0xff]
        %v1362 = vld [vmem:[#allocation3 + $0xf0] sm:$0xff]
        %v1363 = vld [vmem:[#allocation3 + $0xf8] sm:$0xff]
        %1364 = vmin.xlane.f32.xlu0 %v1332
        %v1365 = vpop.xlane.xlu0 %1364
        %1366 = vmin.xlane.f32.xlu0 %v1333
        %v1367 = vpop.xlane.xlu0 %1366
        %1368 = vmin.xlane.f32.xlu0 %v1334
        %v1369 = vpop.xlane.xlu0 %1368
        %1370 = vmin.xlane.f32.xlu0 %v1335
        %v1371 = vpop.xlane.xlu0 %1370
        %1372 = vmin.xlane.f32.xlu0 %v1336
        %v1373 = vpop.xlane.xlu0 %1372
        %1374 = vmin.xlane.f32.xlu0 %v1337
        %v1375 = vpop.xlane.xlu0 %1374
        %1376 = vmin.xlane.f32.xlu0 %v1338
        %v1377 = vpop.xlane.xlu0 %1376
        %1378 = vmin.xlane.f32.xlu0 %v1339
        %v1379 = vpop.xlane.xlu0 %1378
        %1380 = vmin.xlane.f32.xlu0 %v1340
        %v1381 = vpop.xlane.xlu0 %1380
        %1382 = vmin.xlane.f32.xlu0 %v1341
        %v1383 = vpop.xlane.xlu0 %1382
        %1384 = vmin.xlane.f32.xlu0 %v1342
        %v1385 = vpop.xlane.xlu0 %1384
        %1386 = vmin.xlane.f32.xlu0 %v1343
        %v1387 = vpop.xlane.xlu0 %1386
        %1388 = vmin.xlane.f32.xlu0 %v1344
        %v1389 = vpop.xlane.xlu0 %1388
        %1390 = vmin.xlane.f32.xlu0 %v1345
        %v1391 = vpop.xlane.xlu0 %1390
        %1392 = vmin.xlane.f32.xlu0 %v1346
        %v1393 = vpop.xlane.xlu0 %1392
        %1394 = vmin.xlane.f32.xlu0 %v1347
        %v1395 = vpop.xlane.xlu0 %1394
        %1396 = vmin.xlane.f32.xlu0 %v1348
        %v1397 = vpop.xlane.xlu0 %1396
        %1398 = vmin.xlane.f32.xlu0 %v1349
        %v1399 = vpop.xlane.xlu0 %1398
        %1400 = vmin.xlane.f32.xlu0 %v1350
        %v1401 = vpop.xlane.xlu0 %1400
        %1402 = vmin.xlane.f32.xlu0 %v1351
        %v1403 = vpop.xlane.xlu0 %1402
        %1404 = vmin.xlane.f32.xlu0 %v1352
        %v1405 = vpop.xlane.xlu0 %1404
        %1406 = vmin.xlane.f32.xlu0 %v1353
        %v1407 = vpop.xlane.xlu0 %1406
        %1408 = vmin.xlane.f32.xlu0 %v1354
        %v1409 = vpop.xlane.xlu0 %1408
        %1410 = vmin.xlane.f32.xlu0 %v1355
        %v1411 = vpop.xlane.xlu0 %1410
        %1412 = vmin.xlane.f32.xlu0 %v1356
        %v1413 = vpop.xlane.xlu0 %1412
        %1414 = vmin.xlane.f32.xlu0 %v1357
        %v1415 = vpop.xlane.xlu0 %1414
        %1416 = vmin.xlane.f32.xlu0 %v1358
        %v1417 = vpop.xlane.xlu0 %1416
        %1418 = vmin.xlane.f32.xlu0 %v1359
        %v1419 = vpop.xlane.xlu0 %1418
        %1420 = vmin.xlane.f32.xlu0 %v1360
        %v1421 = vpop.xlane.xlu0 %1420
        %1422 = vmin.xlane.f32.xlu0 %v1361
        %v1423 = vpop.xlane.xlu0 %1422
        %1424 = vmin.xlane.f32.xlu0 %v1362
        %v1425 = vpop.xlane.xlu0 %1424
        %1426 = vmin.xlane.f32.xlu0 %v1363
        %v1427 = vpop.xlane.xlu0 %1426
        %v1428 = vld [vmem:[%s243] sm:$0x1]
        %v1429 = vmax.f32 %v1365, 0.0
        %v1430 = vmax.f32 %v1367, 0.0
        %v1431 = vmax.f32 %v1369, 0.0
        %v1432 = vmax.f32 %v1371, 0.0
        %v1433 = vmax.f32 %v1373, 0.0
        %v1434 = vmax.f32 %v1375, 0.0
        %v1435 = vmax.f32 %v1377, 0.0
        %v1436 = vmax.f32 %v1379, 0.0
        %v1437 = vmax.f32 %v1381, 0.0
        %v1438 = vmax.f32 %v1383, 0.0
        %v1439 = vmax.f32 %v1385, 0.0
        %v1440 = vmax.f32 %v1387, 0.0
        %v1441 = vmax.f32 %v1389, 0.0
        %v1442 = vmax.f32 %v1391, 0.0
        %v1443 = vmax.f32 %v1393, 0.0
        %v1444 = vmax.f32 %v1395, 0.0
        %v1445 = vmax.f32 %v1397, 0.0
        %v1446 = vmax.f32 %v1399, 0.0
        %v1447 = vmax.f32 %v1401, 0.0
        %v1448 = vmax.f32 %v1403, 0.0
        %v1449 = vmax.f32 %v1405, 0.0
        %v1450 = vmax.f32 %v1407, 0.0
        %v1451 = vmax.f32 %v1409, 0.0
        %v1452 = vmax.f32 %v1411, 0.0
        %v1453 = vmax.f32 %v1413, 0.0
        %v1454 = vmax.f32 %v1415, 0.0
        %v1455 = vmax.f32 %v1417, 0.0
        %v1456 = vmax.f32 %v1419, 0.0
        %v1457 = vmax.f32 %v1421, 0.0
        %v1458 = vmax.f32 %v1423, 0.0
        %v1459 = vmax.f32 %v1425, 0.0
        %v1460 = vmax.f32 %v1427, 0.0
        %v1461 = vrsqrt.pop %v1429
        %v1462 = vmul.f32 %v1461, %v1429
        %v1463 = vmul.f32 %v1462, %v1461
        %v1464 = vmul.f32 0.5, %v1463
        %v1465 = vsub.f32 1.5, %v1464
        %v1466 = vmul.f32 %v1461, %v1465
        %v1467 = vmul.f32 %v1429, %v1466
        %vm1468 = vcmp.eq.f32.partialorder %v1429, inf
        %v1469 = vsel %vm1468, %v1429, %v1467
        %vm1470 = vcmp.eq.f32.partialorder %v1429, 0.0
        %v1471 = vand.u32 %v1429, 2147483648
        %v1472 = vsel %vm1470, %v1471, %v1469
        %v1473 = vrsqrt.pop %v1430
        %v1474 = vmul.f32 %v1473, %v1430
        %v1475 = vmul.f32 %v1474, %v1473
        %v1476 = vmul.f32 0.5, %v1475
        %v1477 = vsub.f32 1.5, %v1476
        %v1478 = vmul.f32 %v1473, %v1477
        %v1479 = vmul.f32 %v1430, %v1478
        %vm1480 = vcmp.eq.f32.partialorder %v1430, inf
        %v1481 = vsel %vm1480, %v1430, %v1479
        %vm1482 = vcmp.eq.f32.partialorder %v1430, 0.0
        %v1483 = vand.u32 %v1430, 2147483648
        %v1484 = vsel %vm1482, %v1483, %v1481
        %v1485 = vrsqrt.pop %v1431
        %v1486 = vmul.f32 %v1485, %v1431
        %v1487 = vmul.f32 %v1486, %v1485
        %v1488 = vmul.f32 0.5, %v1487
        %v1489 = vsub.f32 1.5, %v1488
        %v1490 = vmul.f32 %v1485, %v1489
        %v1491 = vmul.f32 %v1431, %v1490
        %vm1492 = vcmp.eq.f32.partialorder %v1431, inf
        %v1493 = vsel %vm1492, %v1431, %v1491
        %vm1494 = vcmp.eq.f32.partialorder %v1431, 0.0
        %v1495 = vand.u32 %v1431, 2147483648
        %v1496 = vsel %vm1494, %v1495, %v1493
        %v1497 = vrsqrt.pop %v1432
        %v1498 = vmul.f32 %v1497, %v1432
        %v1499 = vmul.f32 %v1498, %v1497
        %v1500 = vmul.f32 0.5, %v1499
        %v1501 = vsub.f32 1.5, %v1500
        %v1502 = vmul.f32 %v1497, %v1501
        %v1503 = vmul.f32 %v1432, %v1502
        %vm1504 = vcmp.eq.f32.partialorder %v1432, inf
        %v1505 = vsel %vm1504, %v1432, %v1503
        %vm1506 = vcmp.eq.f32.partialorder %v1432, 0.0
        %v1507 = vand.u32 %v1432, 2147483648
        %v1508 = vsel %vm1506, %v1507, %v1505
        %v1509 = vrsqrt.pop %v1433
        %v1510 = vmul.f32 %v1509, %v1433
        %v1511 = vmul.f32 %v1510, %v1509
        %v1512 = vmul.f32 0.5, %v1511
        %v1513 = vsub.f32 1.5, %v1512
        %v1514 = vmul.f32 %v1509, %v1513
        %v1515 = vmul.f32 %v1433, %v1514
        %vm1516 = vcmp.eq.f32.partialorder %v1433, inf
        %v1517 = vsel %vm1516, %v1433, %v1515
        %vm1518 = vcmp.eq.f32.partialorder %v1433, 0.0
        %v1519 = vand.u32 %v1433, 2147483648
        %v1520 = vsel %vm1518, %v1519, %v1517
        %v1521 = vrsqrt.pop %v1434
        %v1522 = vmul.f32 %v1521, %v1434
        %v1523 = vmul.f32 %v1522, %v1521
        %v1524 = vmul.f32 0.5, %v1523
        %v1525 = vsub.f32 1.5, %v1524
        %v1526 = vmul.f32 %v1521, %v1525
        %v1527 = vmul.f32 %v1434, %v1526
        %vm1528 = vcmp.eq.f32.partialorder %v1434, inf
        %v1529 = vsel %vm1528, %v1434, %v1527
        %vm1530 = vcmp.eq.f32.partialorder %v1434, 0.0
        %v1531 = vand.u32 %v1434, 2147483648
        %v1532 = vsel %vm1530, %v1531, %v1529
        %v1533 = vrsqrt.pop %v1435
        %v1534 = vmul.f32 %v1533, %v1435
        %v1535 = vmul.f32 %v1534, %v1533
        %v1536 = vmul.f32 0.5, %v1535
        %v1537 = vsub.f32 1.5, %v1536
        %v1538 = vmul.f32 %v1533, %v1537
        %v1539 = vmul.f32 %v1435, %v1538
        %vm1540 = vcmp.eq.f32.partialorder %v1435, inf
        %v1541 = vsel %vm1540, %v1435, %v1539
        %vm1542 = vcmp.eq.f32.partialorder %v1435, 0.0
        %v1543 = vand.u32 %v1435, 2147483648
        %v1544 = vsel %vm1542, %v1543, %v1541
        %v1545 = vrsqrt.pop %v1436
        %v1546 = vmul.f32 %v1545, %v1436
        %v1547 = vmul.f32 %v1546, %v1545
        %v1548 = vmul.f32 0.5, %v1547
        %v1549 = vsub.f32 1.5, %v1548
        %v1550 = vmul.f32 %v1545, %v1549
        %v1551 = vmul.f32 %v1436, %v1550
        %vm1552 = vcmp.eq.f32.partialorder %v1436, inf
        %v1553 = vsel %vm1552, %v1436, %v1551
        %vm1554 = vcmp.eq.f32.partialorder %v1436, 0.0
        %v1555 = vand.u32 %v1436, 2147483648
        %v1556 = vsel %vm1554, %v1555, %v1553
        %v1557 = vrsqrt.pop %v1437
        %v1558 = vmul.f32 %v1557, %v1437
        %v1559 = vmul.f32 %v1558, %v1557
        %v1560 = vmul.f32 0.5, %v1559
        %v1561 = vsub.f32 1.5, %v1560
        %v1562 = vmul.f32 %v1557, %v1561
        %v1563 = vmul.f32 %v1437, %v1562
        %vm1564 = vcmp.eq.f32.partialorder %v1437, inf
        %v1565 = vsel %vm1564, %v1437, %v1563
        %vm1566 = vcmp.eq.f32.partialorder %v1437, 0.0
        %v1567 = vand.u32 %v1437, 2147483648
        %v1568 = vsel %vm1566, %v1567, %v1565
        %v1569 = vrsqrt.pop %v1438
        %v1570 = vmul.f32 %v1569, %v1438
        %v1571 = vmul.f32 %v1570, %v1569
        %v1572 = vmul.f32 0.5, %v1571
        %v1573 = vsub.f32 1.5, %v1572
        %v1574 = vmul.f32 %v1569, %v1573
        %v1575 = vmul.f32 %v1438, %v1574
        %vm1576 = vcmp.eq.f32.partialorder %v1438, inf
        %v1577 = vsel %vm1576, %v1438, %v1575
        %vm1578 = vcmp.eq.f32.partialorder %v1438, 0.0
        %v1579 = vand.u32 %v1438, 2147483648
        %v1580 = vsel %vm1578, %v1579, %v1577
        %v1581 = vrsqrt.pop %v1439
        %v1582 = vmul.f32 %v1581, %v1439
        %v1583 = vmul.f32 %v1582, %v1581
        %v1584 = vmul.f32 0.5, %v1583
        %v1585 = vsub.f32 1.5, %v1584
        %v1586 = vmul.f32 %v1581, %v1585
        %v1587 = vmul.f32 %v1439, %v1586
        %vm1588 = vcmp.eq.f32.partialorder %v1439, inf
        %v1589 = vsel %vm1588, %v1439, %v1587
        %vm1590 = vcmp.eq.f32.partialorder %v1439, 0.0
        %v1591 = vand.u32 %v1439, 2147483648
        %v1592 = vsel %vm1590, %v1591, %v1589
        %v1593 = vrsqrt.pop %v1440
        %v1594 = vmul.f32 %v1593, %v1440
        %v1595 = vmul.f32 %v1594, %v1593
        %v1596 = vmul.f32 0.5, %v1595
        %v1597 = vsub.f32 1.5, %v1596
        %v1598 = vmul.f32 %v1593, %v1597
        %v1599 = vmul.f32 %v1440, %v1598
        %vm1600 = vcmp.eq.f32.partialorder %v1440, inf
        %v1601 = vsel %vm1600, %v1440, %v1599
        %vm1602 = vcmp.eq.f32.partialorder %v1440, 0.0
        %v1603 = vand.u32 %v1440, 2147483648
        %v1604 = vsel %vm1602, %v1603, %v1601
        %v1605 = vrsqrt.pop %v1441
        %v1606 = vmul.f32 %v1605, %v1441
        %v1607 = vmul.f32 %v1606, %v1605
        %v1608 = vmul.f32 0.5, %v1607
        %v1609 = vsub.f32 1.5, %v1608
        %v1610 = vmul.f32 %v1605, %v1609
        %v1611 = vmul.f32 %v1441, %v1610
        %vm1612 = vcmp.eq.f32.partialorder %v1441, inf
        %v1613 = vsel %vm1612, %v1441, %v1611
        %vm1614 = vcmp.eq.f32.partialorder %v1441, 0.0
        %v1615 = vand.u32 %v1441, 2147483648
        %v1616 = vsel %vm1614, %v1615, %v1613
        %v1617 = vrsqrt.pop %v1442
        %v1618 = vmul.f32 %v1617, %v1442
        %v1619 = vmul.f32 %v1618, %v1617
        %v1620 = vmul.f32 0.5, %v1619
        %v1621 = vsub.f32 1.5, %v1620
        %v1622 = vmul.f32 %v1617, %v1621
        %v1623 = vmul.f32 %v1442, %v1622
        %vm1624 = vcmp.eq.f32.partialorder %v1442, inf
        %v1625 = vsel %vm1624, %v1442, %v1623
        %vm1626 = vcmp.eq.f32.partialorder %v1442, 0.0
        %v1627 = vand.u32 %v1442, 2147483648
        %v1628 = vsel %vm1626, %v1627, %v1625
        %v1629 = vrsqrt.pop %v1443
        %v1630 = vmul.f32 %v1629, %v1443
        %v1631 = vmul.f32 %v1630, %v1629
        %v1632 = vmul.f32 0.5, %v1631
        %v1633 = vsub.f32 1.5, %v1632
        %v1634 = vmul.f32 %v1629, %v1633
        %v1635 = vmul.f32 %v1443, %v1634
        %vm1636 = vcmp.eq.f32.partialorder %v1443, inf
        %v1637 = vsel %vm1636, %v1443, %v1635
        %vm1638 = vcmp.eq.f32.partialorder %v1443, 0.0
        %v1639 = vand.u32 %v1443, 2147483648
        %v1640 = vsel %vm1638, %v1639, %v1637
        %v1641 = vrsqrt.pop %v1444
        %v1642 = vmul.f32 %v1641, %v1444
        %v1643 = vmul.f32 %v1642, %v1641
        %v1644 = vmul.f32 0.5, %v1643
        %v1645 = vsub.f32 1.5, %v1644
        %v1646 = vmul.f32 %v1641, %v1645
        %v1647 = vmul.f32 %v1444, %v1646
        %vm1648 = vcmp.eq.f32.partialorder %v1444, inf
        %v1649 = vsel %vm1648, %v1444, %v1647
        %vm1650 = vcmp.eq.f32.partialorder %v1444, 0.0
        %v1651 = vand.u32 %v1444, 2147483648
        %v1652 = vsel %vm1650, %v1651, %v1649
        %v1653 = vrsqrt.pop %v1445
        %v1654 = vmul.f32 %v1653, %v1445
        %v1655 = vmul.f32 %v1654, %v1653
        %v1656 = vmul.f32 0.5, %v1655
        %v1657 = vsub.f32 1.5, %v1656
        %v1658 = vmul.f32 %v1653, %v1657
        %v1659 = vmul.f32 %v1445, %v1658
        %vm1660 = vcmp.eq.f32.partialorder %v1445, inf
        %v1661 = vsel %vm1660, %v1445, %v1659
        %vm1662 = vcmp.eq.f32.partialorder %v1445, 0.0
        %v1663 = vand.u32 %v1445, 2147483648
        %v1664 = vsel %vm1662, %v1663, %v1661
        %v1665 = vrsqrt.pop %v1446
        %v1666 = vmul.f32 %v1665, %v1446
        %v1667 = vmul.f32 %v1666, %v1665
        %v1668 = vmul.f32 0.5, %v1667
        %v1669 = vsub.f32 1.5, %v1668
        %v1670 = vmul.f32 %v1665, %v1669
        %v1671 = vmul.f32 %v1446, %v1670
        %vm1672 = vcmp.eq.f32.partialorder %v1446, inf
        %v1673 = vsel %vm1672, %v1446, %v1671
        %vm1674 = vcmp.eq.f32.partialorder %v1446, 0.0
        %v1675 = vand.u32 %v1446, 2147483648
        %v1676 = vsel %vm1674, %v1675, %v1673
        %v1677 = vrsqrt.pop %v1447
        %v1678 = vmul.f32 %v1677, %v1447
        %v1679 = vmul.f32 %v1678, %v1677
        %v1680 = vmul.f32 0.5, %v1679
        %v1681 = vsub.f32 1.5, %v1680
        %v1682 = vmul.f32 %v1677, %v1681
        %v1683 = vmul.f32 %v1447, %v1682
        %vm1684 = vcmp.eq.f32.partialorder %v1447, inf
        %v1685 = vsel %vm1684, %v1447, %v1683
        %vm1686 = vcmp.eq.f32.partialorder %v1447, 0.0
        %v1687 = vand.u32 %v1447, 2147483648
        %v1688 = vsel %vm1686, %v1687, %v1685
        %v1689 = vrsqrt.pop %v1448
        %v1690 = vmul.f32 %v1689, %v1448
        %v1691 = vmul.f32 %v1690, %v1689
        %v1692 = vmul.f32 0.5, %v1691
        %v1693 = vsub.f32 1.5, %v1692
        %v1694 = vmul.f32 %v1689, %v1693
        %v1695 = vmul.f32 %v1448, %v1694
        %vm1696 = vcmp.eq.f32.partialorder %v1448, inf
        %v1697 = vsel %vm1696, %v1448, %v1695
        %vm1698 = vcmp.eq.f32.partialorder %v1448, 0.0
        %v1699 = vand.u32 %v1448, 2147483648
        %v1700 = vsel %vm1698, %v1699, %v1697
        %v1701 = vrsqrt.pop %v1449
        %v1702 = vmul.f32 %v1701, %v1449
        %v1703 = vmul.f32 %v1702, %v1701
        %v1704 = vmul.f32 0.5, %v1703
        %v1705 = vsub.f32 1.5, %v1704
        %v1706 = vmul.f32 %v1701, %v1705
        %v1707 = vmul.f32 %v1449, %v1706
        %vm1708 = vcmp.eq.f32.partialorder %v1449, inf
        %v1709 = vsel %vm1708, %v1449, %v1707
        %vm1710 = vcmp.eq.f32.partialorder %v1449, 0.0
        %v1711 = vand.u32 %v1449, 2147483648
        %v1712 = vsel %vm1710, %v1711, %v1709
        %v1713 = vrsqrt.pop %v1450
        %v1714 = vmul.f32 %v1713, %v1450
        %v1715 = vmul.f32 %v1714, %v1713
        %v1716 = vmul.f32 0.5, %v1715
        %v1717 = vsub.f32 1.5, %v1716
        %v1718 = vmul.f32 %v1713, %v1717
        %v1719 = vmul.f32 %v1450, %v1718
        %vm1720 = vcmp.eq.f32.partialorder %v1450, inf
        %v1721 = vsel %vm1720, %v1450, %v1719
        %vm1722 = vcmp.eq.f32.partialorder %v1450, 0.0
        %v1723 = vand.u32 %v1450, 2147483648
        %v1724 = vsel %vm1722, %v1723, %v1721
        %v1725 = vrsqrt.pop %v1451
        %v1726 = vmul.f32 %v1725, %v1451
        %v1727 = vmul.f32 %v1726, %v1725
        %v1728 = vmul.f32 0.5, %v1727
        %v1729 = vsub.f32 1.5, %v1728
        %v1730 = vmul.f32 %v1725, %v1729
        %v1731 = vmul.f32 %v1451, %v1730
        %vm1732 = vcmp.eq.f32.partialorder %v1451, inf
        %v1733 = vsel %vm1732, %v1451, %v1731
        %vm1734 = vcmp.eq.f32.partialorder %v1451, 0.0
        %v1735 = vand.u32 %v1451, 2147483648
        %v1736 = vsel %vm1734, %v1735, %v1733
        %v1737 = vrsqrt.pop %v1452
        %v1738 = vmul.f32 %v1737, %v1452
        %v1739 = vmul.f32 %v1738, %v1737
        %v1740 = vmul.f32 0.5, %v1739
        %v1741 = vsub.f32 1.5, %v1740
        %v1742 = vmul.f32 %v1737, %v1741
        %v1743 = vmul.f32 %v1452, %v1742
        %vm1744 = vcmp.eq.f32.partialorder %v1452, inf
        %v1745 = vsel %vm1744, %v1452, %v1743
        %vm1746 = vcmp.eq.f32.partialorder %v1452, 0.0
        %v1747 = vand.u32 %v1452, 2147483648
        %v1748 = vsel %vm1746, %v1747, %v1745
        %v1749 = vrsqrt.pop %v1453
        %v1750 = vmul.f32 %v1749, %v1453
        %v1751 = vmul.f32 %v1750, %v1749
        %v1752 = vmul.f32 0.5, %v1751
        %v1753 = vsub.f32 1.5, %v1752
        %v1754 = vmul.f32 %v1749, %v1753
        %v1755 = vmul.f32 %v1453, %v1754
        %vm1756 = vcmp.eq.f32.partialorder %v1453, inf
        %v1757 = vsel %vm1756, %v1453, %v1755
        %vm1758 = vcmp.eq.f32.partialorder %v1453, 0.0
        %v1759 = vand.u32 %v1453, 2147483648
        %v1760 = vsel %vm1758, %v1759, %v1757
        %v1761 = vrsqrt.pop %v1454
        %v1762 = vmul.f32 %v1761, %v1454
        %v1763 = vmul.f32 %v1762, %v1761
        %v1764 = vmul.f32 0.5, %v1763
        %v1765 = vsub.f32 1.5, %v1764
        %v1766 = vmul.f32 %v1761, %v1765
        %v1767 = vmul.f32 %v1454, %v1766
        %vm1768 = vcmp.eq.f32.partialorder %v1454, inf
        %v1769 = vsel %vm1768, %v1454, %v1767
        %vm1770 = vcmp.eq.f32.partialorder %v1454, 0.0
        %v1771 = vand.u32 %v1454, 2147483648
        %v1772 = vsel %vm1770, %v1771, %v1769
        %v1773 = vrsqrt.pop %v1455
        %v1774 = vmul.f32 %v1773, %v1455
        %v1775 = vmul.f32 %v1774, %v1773
        %v1776 = vmul.f32 0.5, %v1775
        %v1777 = vsub.f32 1.5, %v1776
        %v1778 = vmul.f32 %v1773, %v1777
        %v1779 = vmul.f32 %v1455, %v1778
        %vm1780 = vcmp.eq.f32.partialorder %v1455, inf
        %v1781 = vsel %vm1780, %v1455, %v1779
        %vm1782 = vcmp.eq.f32.partialorder %v1455, 0.0
        %v1783 = vand.u32 %v1455, 2147483648
        %v1784 = vsel %vm1782, %v1783, %v1781
        %v1785 = vrsqrt.pop %v1456
        %v1786 = vmul.f32 %v1785, %v1456
        %v1787 = vmul.f32 %v1786, %v1785
        %v1788 = vmul.f32 0.5, %v1787
        %v1789 = vsub.f32 1.5, %v1788
        %v1790 = vmul.f32 %v1785, %v1789
        %v1791 = vmul.f32 %v1456, %v1790
        %vm1792 = vcmp.eq.f32.partialorder %v1456, inf
        %v1793 = vsel %vm1792, %v1456, %v1791
        %vm1794 = vcmp.eq.f32.partialorder %v1456, 0.0
        %v1795 = vand.u32 %v1456, 2147483648
        %v1796 = vsel %vm1794, %v1795, %v1793
        %v1797 = vrsqrt.pop %v1457
        %v1798 = vmul.f32 %v1797, %v1457
        %v1799 = vmul.f32 %v1798, %v1797
        %v1800 = vmul.f32 0.5, %v1799
        %v1801 = vsub.f32 1.5, %v1800
        %v1802 = vmul.f32 %v1797, %v1801
        %v1803 = vmul.f32 %v1457, %v1802
        %vm1804 = vcmp.eq.f32.partialorder %v1457, inf
        %v1805 = vsel %vm1804, %v1457, %v1803
        %vm1806 = vcmp.eq.f32.partialorder %v1457, 0.0
        %v1807 = vand.u32 %v1457, 2147483648
        %v1808 = vsel %vm1806, %v1807, %v1805
        %v1809 = vrsqrt.pop %v1458
        %v1810 = vmul.f32 %v1809, %v1458
        %v1811 = vmul.f32 %v1810, %v1809
        %v1812 = vmul.f32 0.5, %v1811
        %v1813 = vsub.f32 1.5, %v1812
        %v1814 = vmul.f32 %v1809, %v1813
        %v1815 = vmul.f32 %v1458, %v1814
        %vm1816 = vcmp.eq.f32.partialorder %v1458, inf
        %v1817 = vsel %vm1816, %v1458, %v1815
        %vm1818 = vcmp.eq.f32.partialorder %v1458, 0.0
        %v1819 = vand.u32 %v1458, 2147483648
        %v1820 = vsel %vm1818, %v1819, %v1817
        %v1821 = vrsqrt.pop %v1459
        %v1822 = vmul.f32 %v1821, %v1459
        %v1823 = vmul.f32 %v1822, %v1821
        %v1824 = vmul.f32 0.5, %v1823
        %v1825 = vsub.f32 1.5, %v1824
        %v1826 = vmul.f32 %v1821, %v1825
        %v1827 = vmul.f32 %v1459, %v1826
        %vm1828 = vcmp.eq.f32.partialorder %v1459, inf
        %v1829 = vsel %vm1828, %v1459, %v1827
        %vm1830 = vcmp.eq.f32.partialorder %v1459, 0.0
        %v1831 = vand.u32 %v1459, 2147483648
        %v1832 = vsel %vm1830, %v1831, %v1829
        %v1833 = vrsqrt.pop %v1460
        %v1834 = vmul.f32 %v1833, %v1460
        %v1835 = vmul.f32 %v1834, %v1833
        %v1836 = vmul.f32 0.5, %v1835
        %v1837 = vsub.f32 1.5, %v1836
        %v1838 = vmul.f32 %v1833, %v1837
        %v1839 = vmul.f32 %v1460, %v1838
        %vm1840 = vcmp.eq.f32.partialorder %v1460, inf
        %v1841 = vsel %vm1840, %v1460, %v1839
        %vm1842 = vcmp.eq.f32.partialorder %v1460, 0.0
        %v1843 = vand.u32 %v1460, 2147483648
        %v1844 = vsel %vm1842, %v1843, %v1841
        %vm1845 = vcmask 7168
        %v1846 = vsel %vm1845, %v1472, 0.0
        %v1847 = vsel %vm1845, %v1484, 0.0
        %v1848 = vadd.f32 %v1846, %v1847
        %v1849 = vsel %vm1845, %v1496, 0.0
        %v1850 = vadd.f32 %v1848, %v1849
        %v1851 = vsel %vm1845, %v1508, 0.0
        %v1852 = vadd.f32 %v1850, %v1851
        %v1853 = vsel %vm1845, %v1520, 0.0
        %v1854 = vadd.f32 %v1852, %v1853
        %v1855 = vsel %vm1845, %v1532, 0.0
        %v1856 = vadd.f32 %v1854, %v1855
        %v1857 = vsel %vm1845, %v1544, 0.0
        %v1858 = vadd.f32 %v1856, %v1857
        %v1859 = vsel %vm1845, %v1556, 0.0
        %v1860 = vadd.f32 %v1858, %v1859
        %v1861 = vsel %vm1845, %v1568, 0.0
        %v1862 = vadd.f32 %v1860, %v1861
        %v1863 = vsel %vm1845, %v1580, 0.0
        %v1864 = vadd.f32 %v1862, %v1863
        %v1865 = vsel %vm1845, %v1592, 0.0
        %v1866 = vadd.f32 %v1864, %v1865
        %v1867 = vsel %vm1845, %v1604, 0.0
        %v1868 = vadd.f32 %v1866, %v1867
        %v1869 = vsel %vm1845, %v1616, 0.0
        %v1870 = vadd.f32 %v1868, %v1869
        %v1871 = vsel %vm1845, %v1628, 0.0
        %v1872 = vadd.f32 %v1870, %v1871
        %v1873 = vsel %vm1845, %v1640, 0.0
        %v1874 = vadd.f32 %v1872, %v1873
        %v1875 = vsel %vm1845, %v1652, 0.0
        %v1876 = vadd.f32 %v1874, %v1875
        %v1877 = vsel %vm1845, %v1664, 0.0
        %v1878 = vadd.f32 %v1876, %v1877
        %v1879 = vsel %vm1845, %v1676, 0.0
        %v1880 = vadd.f32 %v1878, %v1879
        %v1881 = vsel %vm1845, %v1688, 0.0
        %v1882 = vadd.f32 %v1880, %v1881
        %v1883 = vsel %vm1845, %v1700, 0.0
        %v1884 = vadd.f32 %v1882, %v1883
        %v1885 = vsel %vm1845, %v1712, 0.0
        %v1886 = vadd.f32 %v1884, %v1885
        %v1887 = vsel %vm1845, %v1724, 0.0
        %v1888 = vadd.f32 %v1886, %v1887
        %v1889 = vsel %vm1845, %v1736, 0.0
        %v1890 = vadd.f32 %v1888, %v1889
        %v1891 = vsel %vm1845, %v1748, 0.0
        %v1892 = vadd.f32 %v1890, %v1891
        %v1893 = vsel %vm1845, %v1760, 0.0
        %v1894 = vadd.f32 %v1892, %v1893
        %v1895 = vsel %vm1845, %v1772, 0.0
        %v1896 = vadd.f32 %v1894, %v1895
        %v1897 = vsel %vm1845, %v1784, 0.0
        %v1898 = vadd.f32 %v1896, %v1897
        %v1899 = vsel %vm1845, %v1796, 0.0
        %v1900 = vadd.f32 %v1898, %v1899
        %v1901 = vsel %vm1845, %v1808, 0.0
        %v1902 = vadd.f32 %v1900, %v1901
        %v1903 = vsel %vm1845, %v1820, 0.0
        %v1904 = vadd.f32 %v1902, %v1903
        %v1905 = vsel %vm1845, %v1832, 0.0
        %v1906 = vadd.f32 %v1904, %v1905
        %v1907 = vsel %vm1845, %v1844, 0.0
        %v1908 = vadd.f32 %v1906, %v1907
        %1909 = vadd.xlane.f32.xlu0 %v1908
        %v1910 = vpop.xlane.xlu0 %1909
        %v1911 = vrot.slane %v1910, 4
        %v1912 = vadd.f32 %v1910, %v1911
        %v1913 = vrot.slane %v1912, 2
        %v1914 = vadd.f32 %v1912, %v1913
        %v1915 = vrot.slane %v1914, 1
        %v1916 = vadd.f32 %v1914, %v1915
        %s1917 = vtos %v1916
        %v1918 = vstv %s1917
        %v1919 = vadd.f32 %v1428, %v1918
        %vm1920 = vcmask 0
        %1921 = vst.msk [vmem:[%s243] sm:$0x1] %vm1920, %v1919
      $region44: #{tpu_custom_call.1} parent=27 // pred_fallthru
        _
      %v1922 = vld [vmem:[#allocation2] sm:$0xff]
      %v1923 = vld [vmem:[#allocation2 + $0x8] sm:$0xff]
      %v1924 = vld [vmem:[#allocation2 + $0x10] sm:$0xff]
      %v1925 = vld [vmem:[#allocation2 + $0x18] sm:$0xff]
      %v1926 = vld [vmem:[#allocation2 + $0x20] sm:$0xff]
      %v1927 = vld [vmem:[#allocation2 + $0x28] sm:$0xff]
      %v1928 = vld [vmem:[#allocation2 + $0x30] sm:$0xff]
      %v1929 = vld [vmem:[#allocation2 + $0x38] sm:$0xff]
      %v1930 = vld [vmem:[#allocation2 + $0x40] sm:$0xff]
      %v1931 = vld [vmem:[#allocation2 + $0x48] sm:$0xff]
      %v1932 = vld [vmem:[#allocation2 + $0x50] sm:$0xff]
      %v1933 = vld [vmem:[#allocation2 + $0x58] sm:$0xff]
      %v1934 = vmin.f32 %v1922, %v1930
      %v1935 = vmin.f32 %v1923, %v1931
      %v1936 = vmin.f32 %v1924, %v1932
      %v1937 = vmin.f32 %v1925, %v1933
      %v1938 = vld [vmem:[#allocation2 + $0x60] sm:$0xff]
      %v1939 = vld [vmem:[#allocation2 + $0x68] sm:$0xff]
      %v1940 = vld [vmem:[#allocation2 + $0x70] sm:$0xff]
      %v1941 = vld [vmem:[#allocation2 + $0x78] sm:$0xff]
      %v1942 = vmin.f32 %v1926, %v1938
      %v1943 = vmin.f32 %v1927, %v1939
      %v1944 = vmin.f32 %v1928, %v1940
      %v1945 = vmin.f32 %v1929, %v1941
      %v1946 = vld [vmem:[#allocation2 + $0x80] sm:$0xff]
      %v1947 = vld [vmem:[#allocation2 + $0x88] sm:$0xff]
      %v1948 = vld [vmem:[#allocation2 + $0x90] sm:$0xff]
      %v1949 = vld [vmem:[#allocation2 + $0x98] sm:$0xff]
      %v1950 = vmin.f32 %v1934, %v1946
      %v1951 = vmin.f32 %v1935, %v1947
      %v1952 = vmin.f32 %v1936, %v1948
      %v1953 = vmin.f32 %v1937, %v1949
      %v1954 = vld [vmem:[#allocation2 + $0xa0] sm:$0xff]
      %v1955 = vld [vmem:[#allocation2 + $0xa8] sm:$0xff]
      %v1956 = vld [vmem:[#allocation2 + $0xb0] sm:$0xff]
      %v1957 = vld [vmem:[#allocation2 + $0xb8] sm:$0xff]
      %v1958 = vmin.f32 %v1942, %v1954
      %v1959 = vmin.f32 %v1943, %v1955
      %v1960 = vmin.f32 %v1944, %v1956
      %v1961 = vmin.f32 %v1945, %v1957
      %v1962 = vld [vmem:[#allocation2 + $0xc0] sm:$0xff]
      %v1963 = vld [vmem:[#allocation2 + $0xc8] sm:$0xff]
      %v1964 = vld [vmem:[#allocation2 + $0xd0] sm:$0xff]
      %v1965 = vld [vmem:[#allocation2 + $0xd8] sm:$0xff]
      %v1966 = vmin.f32 %v1950, %v1962
      %v1967 = vmin.f32 %v1951, %v1963
      %v1968 = vmin.f32 %v1952, %v1964
      %v1969 = vmin.f32 %v1953, %v1965
      %v1970 = vld [vmem:[#allocation2 + $0xe0] sm:$0xff]
      %v1971 = vld [vmem:[#allocation2 + $0xe8] sm:$0xff]
      %v1972 = vld [vmem:[#allocation2 + $0xf0] sm:$0xff]
      %v1973 = vld [vmem:[#allocation2 + $0xf8] sm:$0xff]
      %v1974 = vmin.f32 %v1958, %v1970
      %v1975 = vmin.f32 %v1959, %v1971
      %v1976 = vmin.f32 %v1960, %v1972
      %v1977 = vmin.f32 %v1961, %v1973
      %v1978 = vld [vmem:[#allocation2 + $0x100] sm:$0xff]
      %v1979 = vld [vmem:[#allocation2 + $0x108] sm:$0xff]
      %v1980 = vld [vmem:[#allocation2 + $0x110] sm:$0xff]
      %v1981 = vld [vmem:[#allocation2 + $0x118] sm:$0xff]
      %v1982 = vmin.f32 %v1966, %v1978
      %v1983 = vmin.f32 %v1967, %v1979
      %v1984 = vmin.f32 %v1968, %v1980
      %v1985 = vmin.f32 %v1969, %v1981
      %v1986 = vld [vmem:[#allocation2 + $0x120] sm:$0xff]
      %v1987 = vld [vmem:[#allocation2 + $0x128] sm:$0xff]
      %v1988 = vld [vmem:[#allocation2 + $0x130] sm:$0xff]
      %v1989 = vld [vmem:[#allocation2 + $0x138] sm:$0xff]
      %v1990 = vmin.f32 %v1974, %v1986
      %v1991 = vmin.f32 %v1975, %v1987
      %v1992 = vmin.f32 %v1976, %v1988
      %v1993 = vmin.f32 %v1977, %v1989
      %v1994 = vld [vmem:[#allocation2 + $0x140] sm:$0xff]
      %v1995 = vld [vmem:[#allocation2 + $0x148] sm:$0xff]
      %v1996 = vld [vmem:[#allocation2 + $0x150] sm:$0xff]
      %v1997 = vld [vmem:[#allocation2 + $0x158] sm:$0xff]
      %v1998 = vmin.f32 %v1982, %v1994
      %v1999 = vmin.f32 %v1983, %v1995
      %v2000 = vmin.f32 %v1984, %v1996
      %v2001 = vmin.f32 %v1985, %v1997
      %v2002 = vld [vmem:[#allocation2 + $0x160] sm:$0xff]
      %v2003 = vld [vmem:[#allocation2 + $0x168] sm:$0xff]
      %v2004 = vld [vmem:[#allocation2 + $0x170] sm:$0xff]
      %v2005 = vld [vmem:[#allocation2 + $0x178] sm:$0xff]
      %v2006 = vmin.f32 %v1990, %v2002
      %v2007 = vmin.f32 %v1991, %v2003
      %v2008 = vmin.f32 %v1992, %v2004
      %v2009 = vmin.f32 %v1993, %v2005
      %v2010 = vld [vmem:[#allocation2 + $0x180] sm:$0xff]
      %v2011 = vld [vmem:[#allocation2 + $0x188] sm:$0xff]
      %v2012 = vld [vmem:[#allocation2 + $0x190] sm:$0xff]
      %v2013 = vld [vmem:[#allocation2 + $0x198] sm:$0xff]
      %v2014 = vmin.f32 %v1998, %v2010
      %v2015 = vmin.f32 %v1999, %v2011
      %v2016 = vmin.f32 %v2000, %v2012
      %v2017 = vmin.f32 %v2001, %v2013
      %v2018 = vld [vmem:[#allocation2 + $0x1a0] sm:$0xff]
      %v2019 = vld [vmem:[#allocation2 + $0x1a8] sm:$0xff]
      %v2020 = vld [vmem:[#allocation2 + $0x1b0] sm:$0xff]
      %v2021 = vld [vmem:[#allocation2 + $0x1b8] sm:$0xff]
      %v2022 = vmin.f32 %v2006, %v2018
      %v2023 = vmin.f32 %v2007, %v2019
      %v2024 = vmin.f32 %v2008, %v2020
      %v2025 = vmin.f32 %v2009, %v2021
      %v2026 = vld [vmem:[#allocation2 + $0x1c0] sm:$0xff]
      %v2027 = vld [vmem:[#allocation2 + $0x1c8] sm:$0xff]
      %v2028 = vld [vmem:[#allocation2 + $0x1d0] sm:$0xff]
      %v2029 = vld [vmem:[#allocation2 + $0x1d8] sm:$0xff]
      %v2030 = vmin.f32 %v2014, %v2026
      %v2031 = vmin.f32 %v2015, %v2027
      %v2032 = vmin.f32 %v2016, %v2028
      %v2033 = vmin.f32 %v2017, %v2029
      %v2034 = vld [vmem:[#allocation2 + $0x1e0] sm:$0xff]
      %v2035 = vld [vmem:[#allocation2 + $0x1e8] sm:$0xff]
      %v2036 = vld [vmem:[#allocation2 + $0x1f0] sm:$0xff]
      %v2037 = vld [vmem:[#allocation2 + $0x1f8] sm:$0xff]
      %v2038 = vmin.f32 %v2022, %v2034
      %v2039 = vmin.f32 %v2023, %v2035
      %v2040 = vmin.f32 %v2024, %v2036
      %v2041 = vmin.f32 %v2025, %v2037
      %v2042 = vld [vmem:[#allocation2 + $0x200] sm:$0xff]
      %v2043 = vld [vmem:[#allocation2 + $0x208] sm:$0xff]
      %v2044 = vld [vmem:[#allocation2 + $0x210] sm:$0xff]
      %v2045 = vld [vmem:[#allocation2 + $0x218] sm:$0xff]
      %v2046 = vmin.f32 %v2030, %v2042
      %v2047 = vmin.f32 %v2031, %v2043
      %v2048 = vmin.f32 %v2032, %v2044
      %v2049 = vmin.f32 %v2033, %v2045
      %v2050 = vld [vmem:[#allocation2 + $0x220] sm:$0xff]
      %v2051 = vld [vmem:[#allocation2 + $0x228] sm:$0xff]
      %v2052 = vld [vmem:[#allocation2 + $0x230] sm:$0xff]
      %v2053 = vld [vmem:[#allocation2 + $0x238] sm:$0xff]
      %v2054 = vmin.f32 %v2038, %v2050
      %v2055 = vmin.f32 %v2039, %v2051
      %v2056 = vmin.f32 %v2040, %v2052
      %v2057 = vmin.f32 %v2041, %v2053
      %v2058 = vld [vmem:[#allocation2 + $0x240] sm:$0xff]
      %v2059 = vld [vmem:[#allocation2 + $0x248] sm:$0xff]
      %v2060 = vld [vmem:[#allocation2 + $0x250] sm:$0xff]
      %v2061 = vld [vmem:[#allocation2 + $0x258] sm:$0xff]
      %v2062 = vmin.f32 %v2046, %v2058
      %v2063 = vmin.f32 %v2047, %v2059
      %v2064 = vmin.f32 %v2048, %v2060
      %v2065 = vmin.f32 %v2049, %v2061
      %v2066 = vld [vmem:[#allocation2 + $0x260] sm:$0xff]
      %v2067 = vld [vmem:[#allocation2 + $0x268] sm:$0xff]
      %v2068 = vld [vmem:[#allocation2 + $0x270] sm:$0xff]
      %v2069 = vld [vmem:[#allocation2 + $0x278] sm:$0xff]
      %v2070 = vmin.f32 %v2054, %v2066
      %v2071 = vmin.f32 %v2055, %v2067
      %v2072 = vmin.f32 %v2056, %v2068
      %v2073 = vmin.f32 %v2057, %v2069
      %v2074 = vld [vmem:[#allocation2 + $0x280] sm:$0xff]
      %v2075 = vld [vmem:[#allocation2 + $0x288] sm:$0xff]
      %v2076 = vld [vmem:[#allocation2 + $0x290] sm:$0xff]
      %v2077 = vld [vmem:[#allocation2 + $0x298] sm:$0xff]
      %v2078 = vmin.f32 %v2062, %v2074
      %v2079 = vmin.f32 %v2063, %v2075
      %v2080 = vmin.f32 %v2064, %v2076
      %v2081 = vmin.f32 %v2065, %v2077
      %v2082 = vld [vmem:[#allocation2 + $0x2a0] sm:$0xff]
      %v2083 = vld [vmem:[#allocation2 + $0x2a8] sm:$0xff]
      %v2084 = vld [vmem:[#allocation2 + $0x2b0] sm:$0xff]
      %v2085 = vld [vmem:[#allocation2 + $0x2b8] sm:$0xff]
      %v2086 = vmin.f32 %v2070, %v2082
      %v2087 = vmin.f32 %v2071, %v2083
      %v2088 = vmin.f32 %v2072, %v2084
      %v2089 = vmin.f32 %v2073, %v2085
      %v2090 = vld [vmem:[#allocation2 + $0x2c0] sm:$0xff]
      %v2091 = vld [vmem:[#allocation2 + $0x2c8] sm:$0xff]
      %v2092 = vld [vmem:[#allocation2 + $0x2d0] sm:$0xff]
      %v2093 = vld [vmem:[#allocation2 + $0x2d8] sm:$0xff]
      %v2094 = vmin.f32 %v2078, %v2090
      %v2095 = vmin.f32 %v2079, %v2091
      %v2096 = vmin.f32 %v2080, %v2092
      %v2097 = vmin.f32 %v2081, %v2093
      %v2098 = vld [vmem:[#allocation2 + $0x2e0] sm:$0xff]
      %v2099 = vld [vmem:[#allocation2 + $0x2e8] sm:$0xff]
      %v2100 = vld [vmem:[#allocation2 + $0x2f0] sm:$0xff]
      %v2101 = vld [vmem:[#allocation2 + $0x2f8] sm:$0xff]
      %v2102 = vmin.f32 %v2086, %v2098
      %v2103 = vmin.f32 %v2087, %v2099
      %v2104 = vmin.f32 %v2088, %v2100
      %v2105 = vmin.f32 %v2089, %v2101
      %v2106 = vld [vmem:[#allocation2 + $0x300] sm:$0xff]
      %v2107 = vld [vmem:[#allocation2 + $0x308] sm:$0xff]
      %v2108 = vld [vmem:[#allocation2 + $0x310] sm:$0xff]
      %v2109 = vld [vmem:[#allocation2 + $0x318] sm:$0xff]
      %v2110 = vmin.f32 %v2094, %v2106
      %v2111 = vmin.f32 %v2095, %v2107
      %v2112 = vmin.f32 %v2096, %v2108
      %v2113 = vmin.f32 %v2097, %v2109
      %v2114 = vld [vmem:[#allocation2 + $0x320] sm:$0xff]
      %v2115 = vld [vmem:[#allocation2 + $0x328] sm:$0xff]
      %v2116 = vld [vmem:[#allocation2 + $0x330] sm:$0xff]
      %v2117 = vld [vmem:[#allocation2 + $0x338] sm:$0xff]
      %v2118 = vmin.f32 %v2102, %v2114
      %v2119 = vmin.f32 %v2103, %v2115
      %v2120 = vmin.f32 %v2104, %v2116
      %v2121 = vmin.f32 %v2105, %v2117
      %v2122 = vld [vmem:[#allocation2 + $0x340] sm:$0xff]
      %v2123 = vld [vmem:[#allocation2 + $0x348] sm:$0xff]
      %v2124 = vld [vmem:[#allocation2 + $0x350] sm:$0xff]
      %v2125 = vld [vmem:[#allocation2 + $0x358] sm:$0xff]
      %v2126 = vmin.f32 %v2110, %v2122
      %v2127 = vmin.f32 %v2111, %v2123
      %v2128 = vmin.f32 %v2112, %v2124
      %v2129 = vmin.f32 %v2113, %v2125
      %v2130 = vld [vmem:[#allocation2 + $0x360] sm:$0xff]
      %v2131 = vld [vmem:[#allocation2 + $0x368] sm:$0xff]
      %v2132 = vld [vmem:[#allocation2 + $0x370] sm:$0xff]
      %v2133 = vld [vmem:[#allocation2 + $0x378] sm:$0xff]
      %v2134 = vmin.f32 %v2118, %v2130
      %v2135 = vmin.f32 %v2119, %v2131
      %v2136 = vmin.f32 %v2120, %v2132
      %v2137 = vmin.f32 %v2121, %v2133
      %v2138 = vld [vmem:[#allocation2 + $0x380] sm:$0xff]
      %v2139 = vld [vmem:[#allocation2 + $0x388] sm:$0xff]
      %v2140 = vld [vmem:[#allocation2 + $0x390] sm:$0xff]
      %v2141 = vld [vmem:[#allocation2 + $0x398] sm:$0xff]
      %v2142 = vmin.f32 %v2126, %v2138
      %v2143 = vmin.f32 %v2127, %v2139
      %v2144 = vmin.f32 %v2128, %v2140
      %v2145 = vmin.f32 %v2129, %v2141
      %v2146 = vld [vmem:[#allocation2 + $0x3a0] sm:$0xff]
      %v2147 = vld [vmem:[#allocation2 + $0x3a8] sm:$0xff]
      %v2148 = vld [vmem:[#allocation2 + $0x3b0] sm:$0xff]
      %v2149 = vld [vmem:[#allocation2 + $0x3b8] sm:$0xff]
      %v2150 = vmin.f32 %v2134, %v2146
      %v2151 = vmin.f32 %v2135, %v2147
      %v2152 = vmin.f32 %v2136, %v2148
      %v2153 = vmin.f32 %v2137, %v2149
      %v2154 = vld [vmem:[#allocation2 + $0x3c0] sm:$0xff]
      %v2155 = vld [vmem:[#allocation2 + $0x3c8] sm:$0xff]
      %v2156 = vld [vmem:[#allocation2 + $0x3d0] sm:$0xff]
      %v2157 = vld [vmem:[#allocation2 + $0x3d8] sm:$0xff]
      %v2158 = vmin.f32 %v2142, %v2154
      %v2159 = vmin.f32 %v2143, %v2155
      %v2160 = vmin.f32 %v2144, %v2156
      %v2161 = vmin.f32 %v2145, %v2157
      %v2162 = vld [vmem:[#allocation2 + $0x3e0] sm:$0xff]
      %v2163 = vld [vmem:[#allocation2 + $0x3e8] sm:$0xff]
      %v2164 = vld [vmem:[#allocation2 + $0x3f0] sm:$0xff]
      %v2165 = vld [vmem:[#allocation2 + $0x3f8] sm:$0xff]
      %v2166 = vmin.f32 %v2150, %v2162
      %v2167 = vmin.f32 %v2151, %v2163
      %v2168 = vmin.f32 %v2152, %v2164
      %v2169 = vmin.f32 %v2153, %v2165
      %v2170 = vmin.f32 %v2158, %v2166
      %v2171 = vmin.f32 %v2159, %v2167
      %v2172 = vmin.f32 %v2160, %v2168
      %v2173 = vmin.f32 %v2161, %v2169
      // Predicated region
      $region45: #{tpu_custom_call.1} parent=27 // pred_check
        %p2174 = pneg %p247
      $region46: #{tpu_custom_call.1} parent=27 // pred_check_branch
        %2176 = sbr.rel (%p2174) target = $region48
      $region47: #{tpu_custom_call.1} parent=27 // pred_region
        %s2177 = smul.u32 %s22, 4
        %s2178 = smul.addr %s2177, 8
        %s2179 = scalar_lea.vmem [#allocation4], %s2178
        %2180 = vst [vmem:[%s2179] sm:$0xff] %v2170
        %2181 = vst [vmem:[%s2179 + $0x8] sm:$0xff] %v2171
        %2182 = vst [vmem:[%s2179 + $0x10] sm:$0xff] %v2172
        %2183 = vst [vmem:[%s2179 + $0x18] sm:$0xff] %v2173
      $region48: #{tpu_custom_call.1} parent=27 // pred_fallthru
        _
      %p2184 = scmp.gt.s32.totalorder %s21, 0
      // Predicated region
      $region49: #{tpu_custom_call.1} parent=27 // pred_check
        %p2185 = pneg %p2184
      $region50: #{tpu_custom_call.1} parent=27 // pred_check_branch
        %2187 = sbr.rel (%p2185) target = $region52
      $region51: #{tpu_custom_call.1} parent=27 // pred_region
        %s2188 = smul.u32 %s22, 4
        %s2189 = smul.addr %s2188, 8
        %s2190 = scalar_lea.vmem [#allocation4], %s2189
        %v2191 = vld [vmem:[%s2190] sm:$0xff]
        %v2192 = vld [vmem:[%s2190 + $0x8] sm:$0xff]
        %v2193 = vld [vmem:[%s2190 + $0x10] sm:$0xff]
        %v2194 = vld [vmem:[%s2190 + $0x18] sm:$0xff]
        %v2195 = vmin.f32 %v2191, %v2170
        %v2196 = vmin.f32 %v2192, %v2171
        %v2197 = vmin.f32 %v2193, %v2172
        %v2198 = vmin.f32 %v2194, %v2173
        %2199 = vst [vmem:[%s2190] sm:$0xff] %v2195
        %2200 = vst [vmem:[%s2190 + $0x8] sm:$0xff] %v2196
        %2201 = vst [vmem:[%s2190 + $0x10] sm:$0xff] %v2197
        %2202 = vst [vmem:[%s2190 + $0x18] sm:$0xff] %v2198
      $region52: #{tpu_custom_call.1} parent=27 // pred_fallthru
        _
      %p2203 = scmp.eq.s32.totalorder %s21, 1
      // Predicated region
      $region53: #{tpu_custom_call.1} parent=27 // pred_check
        %p2204 = pneg %p2203
      $region54: #{tpu_custom_call.1} parent=27 // pred_check_branch
        %2206 = sbr.rel (%p2204) target = $region56
      $region55: #{tpu_custom_call.1} parent=27 // pred_region
        %s2207 = smul.u32 %s22, 4
        %s2208 = smul.addr %s2207, 8
        %s2209 = scalar_lea.vmem [#allocation4], %s2208
        %v2210 = vld [vmem:[%s2209] sm:$0xff]
        %v2211 = vld [vmem:[%s2209 + $0x8] sm:$0xff]
        %v2212 = vld [vmem:[%s2209 + $0x10] sm:$0xff]
        %v2213 = vld [vmem:[%s2209 + $0x18] sm:$0xff]
        %v2214 = vrot.slane %v2210, 4
        %v2215 = vmin.f32 %v2210, %v2214
        %v2216 = vrot.slane %v2215, 2
        %v2217 = vmin.f32 %v2215, %v2216
        %v2218 = vrot.slane %v2217, 1
        %v2219 = vmin.f32 %v2217, %v2218
        %v2220 = vrot.slane %v2211, 4
        %v2221 = vmin.f32 %v2211, %v2220
        %v2222 = vrot.slane %v2221, 2
        %v2223 = vmin.f32 %v2221, %v2222
        %v2224 = vrot.slane %v2223, 1
        %v2225 = vmin.f32 %v2223, %v2224
        %v2226 = vrot.slane %v2212, 4
        %v2227 = vmin.f32 %v2212, %v2226
        %v2228 = vrot.slane %v2227, 2
        %v2229 = vmin.f32 %v2227, %v2228
        %v2230 = vrot.slane %v2229, 1
        %v2231 = vmin.f32 %v2229, %v2230
        %v2232 = vrot.slane %v2213, 4
        %v2233 = vmin.f32 %v2213, %v2232
        %v2234 = vrot.slane %v2233, 2
        %v2235 = vmin.f32 %v2233, %v2234
        %v2236 = vrot.slane %v2235, 1
        %v2237 = vmin.f32 %v2235, %v2236
        %v2238 = vld [vmem:[%s246] sm:$0x1]
        %v2239 = vmax.f32 %v2219, 0.0
        %v2240 = vmax.f32 %v2225, 0.0
        %v2241 = vmax.f32 %v2231, 0.0
        %v2242 = vmax.f32 %v2237, 0.0
        %v2243 = vrsqrt.pop %v2239
        %v2244 = vmul.f32 %v2243, %v2239
        %v2245 = vmul.f32 %v2244, %v2243
        %v2246 = vmul.f32 0.5, %v2245
        %v2247 = vsub.f32 1.5, %v2246
        %v2248 = vmul.f32 %v2243, %v2247
        %v2249 = vmul.f32 %v2239, %v2248
        %vm2250 = vcmp.eq.f32.partialorder %v2239, inf
        %v2251 = vsel %vm2250, %v2239, %v2249
        %vm2252 = vcmp.eq.f32.partialorder %v2239, 0.0
        %v2253 = vand.u32 %v2239, 2147483648
        %v2254 = vsel %vm2252, %v2253, %v2251
        %v2255 = vrsqrt.pop %v2240
        %v2256 = vmul.f32 %v2255, %v2240
        %v2257 = vmul.f32 %v2256, %v2255
        %v2258 = vmul.f32 0.5, %v2257
        %v2259 = vsub.f32 1.5, %v2258
        %v2260 = vmul.f32 %v2255, %v2259
        %v2261 = vmul.f32 %v2240, %v2260
        %vm2262 = vcmp.eq.f32.partialorder %v2240, inf
        %v2263 = vsel %vm2262, %v2240, %v2261
        %vm2264 = vcmp.eq.f32.partialorder %v2240, 0.0
        %v2265 = vand.u32 %v2240, 2147483648
        %v2266 = vsel %vm2264, %v2265, %v2263
        %v2267 = vrsqrt.pop %v2241
        %v2268 = vmul.f32 %v2267, %v2241
        %v2269 = vmul.f32 %v2268, %v2267
        %v2270 = vmul.f32 0.5, %v2269
        %v2271 = vsub.f32 1.5, %v2270
        %v2272 = vmul.f32 %v2267, %v2271
        %v2273 = vmul.f32 %v2241, %v2272
        %vm2274 = vcmp.eq.f32.partialorder %v2241, inf
        %v2275 = vsel %vm2274, %v2241, %v2273
        %vm2276 = vcmp.eq.f32.partialorder %v2241, 0.0
        %v2277 = vand.u32 %v2241, 2147483648
        %v2278 = vsel %vm2276, %v2277, %v2275
        %v2279 = vrsqrt.pop %v2242
        %v2280 = vmul.f32 %v2279, %v2242
        %v2281 = vmul.f32 %v2280, %v2279
        %v2282 = vmul.f32 0.5, %v2281
        %v2283 = vsub.f32 1.5, %v2282
        %v2284 = vmul.f32 %v2279, %v2283
        %v2285 = vmul.f32 %v2242, %v2284
        %vm2286 = vcmp.eq.f32.partialorder %v2242, inf
        %v2287 = vsel %vm2286, %v2242, %v2285
        %vm2288 = vcmp.eq.f32.partialorder %v2242, 0.0
        %v2289 = vand.u32 %v2242, 2147483648
        %v2290 = vsel %vm2288, %v2289, %v2287
        %vm2291 = vcmask 1040384
        %v2292 = vsel %vm2291, %v2254, 0.0
        %v2293 = vsel %vm2291, %v2266, 0.0
        %v2294 = vadd.f32 %v2292, %v2293
        %v2295 = vsel %vm2291, %v2278, 0.0
        %v2296 = vadd.f32 %v2294, %v2295
        %v2297 = vsel %vm2291, %v2290, 0.0
        %v2298 = vadd.f32 %v2296, %v2297
        %2299 = vadd.xlane.f32.xlu0 %v2298
        %v2300 = vpop.xlane.xlu0 %2299
        %v2301 = vrot.slane %v2300, 4
        %v2302 = vadd.f32 %v2300, %v2301
        %v2303 = vrot.slane %v2302, 2
        %v2304 = vadd.f32 %v2302, %v2303
        %v2305 = vrot.slane %v2304, 1
        %v2306 = vadd.f32 %v2304, %v2305
        %s2307 = vtos %v2306
        %v2308 = vstv %s2307
        %v2309 = vadd.f32 %v2238, %v2308
        %vm2310 = vcmask 0
        %2311 = vst.msk [vmem:[%s246] sm:$0x1] %vm2310, %v2309
      $region56: #{tpu_custom_call.1} parent=27 // pred_fallthru
        _
      %p2312 = scmp.lt.s32.totalorder %s20, 1
      %s2313 = scalar_select %p2312, %s20, 1
      %s2314 = scalar_lea.vmem %s2, %s2313
      %p2315 = scmp.lt.s32.totalorder %s20, 1
      %s2316 = scalar_select %p2315, %s20, 1
      %s2317 = scalar_lea.vmem %s3, %s2316
      // Predicated region
      $region57: #{tpu_custom_call.1} parent=27 // pred_check
        %p2318 = pneg %p108
      $region58: #{tpu_custom_call.1} parent=27 // pred_check_branch
        %2320 = sbr.rel (%p2318) target = $region60
      $region59: #{tpu_custom_call.1} parent=27 // pred_region
        _
      $region60: #{tpu_custom_call.1} parent=27 // pred_fallthru
        _
      // Predicated region
      $region61: #{tpu_custom_call.1} parent=27 // pred_check
        %p2321 = pneg %p134
      $region62: #{tpu_custom_call.1} parent=27 // pred_check_branch
        %2323 = sbr.rel (%p2321) target = $region64
      $region63: #{tpu_custom_call.1} parent=27 // pred_region
        _
      $region64: #{tpu_custom_call.1} parent=27 // pred_fallthru
        _
    $region28: #{tpu_custom_call.1} parent=5 // pred_fallthru
      _
    %p2324 = scmp.le.s32.totalorder 2, %s10
    // Predicated region
    $region65: #{tpu_custom_call.1} parent=5 // pred_check
      %p2325 = pneg %p2324
    $region66: #{tpu_custom_call.1} parent=5 // pred_check_branch
      %2327 = sbr.rel (%p2325) target = $region68
    $region67: #{tpu_custom_call.1} parent=5 // pred_region
      %s2328 = ssub.s32 %s10, 2
      // Predicated region
      $region69: #{tpu_custom_call.1} parent=67 // pred_check
        %p2329 = pneg %p114
      $region70: #{tpu_custom_call.1} parent=67 // pred_check_branch
        %2331 = sbr.rel (%p2329) target = $region72
      $region71: #{tpu_custom_call.1} parent=67 // pred_region
        %p2332 = scmp.lt.s32.totalorder %s23, 1
        %s2333 = scalar_select %p2332, %s23, 1
        %s2334 = scalar_lea.vmem %s2, %s2333
      $region72: #{tpu_custom_call.1} parent=67 // pred_fallthru
        _
      // Predicated region
      $region73: #{tpu_custom_call.1} parent=67 // pred_check
        %p2335 = pneg %p140
      $region74: #{tpu_custom_call.1} parent=67 // pred_check_branch
        %2337 = sbr.rel (%p2335) target = $region76
      $region75: #{tpu_custom_call.1} parent=67 // pred_region
        %p2338 = scmp.lt.s32.totalorder %s23, 1
        %s2339 = scalar_select %p2338, %s23, 1
        %s2340 = scalar_lea.vmem %s3, %s2339
      $region76: #{tpu_custom_call.1} parent=67 // pred_fallthru
        _
    $region68: #{tpu_custom_call.1} parent=5 // pred_fallthru
      _
  $region6: #{tpu_custom_call.1} parent=0 // loop_footer
    %s14 = sadd.s32 1, %s10
  $region7: #{tpu_custom_call.1} parent=0 // loop_footer_branch
    %9 = sbr.rel target = $region3
  $region8: #{tpu_custom_call.1} parent=0 // loop_exit
    _

</llo_original>
